<compile_context>
chip_gen: v7x
topology: tpu7x:2x2x1
jax: 0.10.0
libtpu: 0.0.40
codegen_flags: <defaults>
</compile_context>

<pallas_src>
import math
import jax
import jax.numpy as jnp
from jax.experimental import pallas as pl
from jax.experimental.pallas import tpu as pltpu

# ---------------- config (small synthetic T5 encoder layer) ----------------
B, L = 2, 8            # batch, sequence length
D = 32                 # d_model
H = 4                  # num heads
DH = D // H            # head dim
F_FF = 64              # d_ff
EPS = 1e-6             # layer_norm_epsilon
NUM_BUCKETS = 8        # relative_attention_num_buckets
MAX_DISTANCE = 128


def gelu_new(x):
    # T5 "gelu_new" (tanh approximation)
    return 0.5 * x * (1.0 + jnp.tanh(math.sqrt(2.0 / math.pi)
                                     * (x + 0.044715 * x * x * x)))


# ---------------- relative position bias (glue, bidirectional/encoder) -----
def t5_relative_bucket(relative_position, num_buckets=NUM_BUCKETS,
                       max_distance=MAX_DISTANCE):
    num_buckets //= 2
    rel_buckets = (relative_position > 0).astype(jnp.int32) * num_buckets
    rel_pos = jnp.abs(relative_position)
    max_exact = num_buckets // 2
    is_small = rel_pos < max_exact
    safe = jnp.maximum(rel_pos, 1).astype(jnp.float32)
    rel_if_large = max_exact + (
        jnp.log(safe / max_exact) / math.log(max_distance / max_exact)
        * (num_buckets - max_exact)
    ).astype(jnp.int32)
    rel_if_large = jnp.minimum(rel_if_large, num_buckets - 1)
    return rel_buckets + jnp.where(is_small, rel_pos, rel_if_large)


def compute_rel_bias(rel_emb, qlen, klen):
    ctx = jnp.arange(qlen)[:, None]
    mem = jnp.arange(klen)[None, :]
    buckets = t5_relative_bucket(mem - ctx)          # (qlen, klen)
    bias = rel_emb[buckets]                          # (qlen, klen, H)
    return jnp.transpose(bias, (2, 0, 1))            # (H, qlen, klen)


# ---------------- fused Pallas kernel (whole layer, one invocation) --------
def t5_layer_kernel(x_ref, bm_ref, ln1_ref, wqkv_ref, wo_ref, ln2_ref,
                    wi_ref, wof_ref, out_ref, ctx_ref):
    x = x_ref[...]                                   # (B*L, D) slab

    # --- pre-LN RMSNorm (T5 style: no mean subtraction, no bias) ---
    var = jnp.mean(x * x, axis=-1, keepdims=True)
    normed = x * jax.lax.rsqrt(var + EPS) * ln1_ref[...]

    # --- fused QKV projection: one (B*L, D) x (D, 3D) matmul ---
    # TODO(synk): at real T5 sizes cast matmul inputs to bf16 (keep f32 acc)
    # and tile D/F_FF with a reduction grid axis for the v7x 64 MiB VMEM.
    qkv = jnp.dot(normed, wqkv_ref[...], preferred_element_type=jnp.float32)

    # --- self attention (T5: no 1/sqrt(d) scaling); static unroll over
    #     (batch, head) — B*H = 8 tiny tiles; bias + pad mask pre-summed. ---
    for b in range(B):
        r0 = b * L
        for h in range(H):
            c0 = h * DH
            qh = qkv[r0:r0 + L, c0:c0 + DH]                      # (L, DH)
            kh = qkv[r0:r0 + L, D + c0:D + c0 + DH]              # (L, DH)
            vh = qkv[r0:r0 + L, 2 * D + c0:2 * D + c0 + DH]      # (L, DH)
            # q @ k^T without materializing a transpose
            s = jax.lax.dot_general(qh, kh, (((1,), (1,)), ((), ())),
                                    preferred_element_type=jnp.float32)
            s = s + bm_ref[b, h]                     # relative bias + pad mask
            s = s - jnp.max(s, axis=-1, keepdims=True)
            p = jnp.exp(s)                           # (L, L) unnormalized probs
            ctx_h = jnp.dot(p, vh, preferred_element_type=jnp.float32)
            # normalize the (L, DH) context instead of the (L, L) probs:
            # fewer VPU multiplies; reciprocal lives on the EUP slot.
            inv = pl.reciprocal(jnp.sum(p, axis=-1, keepdims=True), approx=True)
            ctx_ref[pl.ds(r0, L), pl.ds(c0, DH)] = ctx_h * inv

    # --- attention output projection + residual (dropout = identity) ---
    ctx = ctx_ref[...]                               # (B*L, D)
    h1 = x + jnp.dot(ctx, wo_ref[...], preferred_element_type=jnp.float32)

    # --- FFN: RMSNorm -> DenseGatedActDense (fused gate|up) -> residual ---
    var2 = jnp.mean(h1 * h1, axis=-1, keepdims=True)
    normed2 = h1 * jax.lax.rsqrt(var2 + EPS) * ln2_ref[...]
    gu = jnp.dot(normed2, wi_ref[...], preferred_element_type=jnp.float32)
    g = gu[:, :F_FF]
    u = gu[:, F_FF:]
    ff = jnp.dot(gelu_new(g) * u, wof_ref[...],
                 preferred_element_type=jnp.float32)
    out_ref[...] = h1 + ff
    # TODO(synk): dropout (self_attention_output / FFN) omitted — eval mode.
    # TODO(synk): output last dim is 32 lanes at this toy size (masked stores);
    # real T5 d_model (>=512) is already lane-dense so no relayout is added.


def t5_layer_forward(x, mask_add, rel_bias, p):
    # wrapper-side prep (pure layout / fusion, no compute moved off the kernel)
    x2d = x.reshape(B * L, D)
    biasmask = rel_bias[None] + mask_add[:, None, :, :]          # (B, H, L, L)
    wqkv = jnp.concatenate([p["wq"], p["wk"], p["wv"]], axis=1)  # (D, 3D)
    wi = jnp.concatenate([p["wi0"], p["wi1"]], axis=1)           # (D, 2*F_FF)

    vmem = pl.BlockSpec(memory_space=pltpu.MemorySpace.VMEM)
    out2d = pl.pallas_call(
        t5_layer_kernel,
        out_shape=jax.ShapeDtypeStruct((B * L, D), jnp.float32),
        in_specs=[vmem] * 8,
        out_specs=vmem,
        scratch_shapes=[pltpu.VMEM((B * L, D), jnp.float32)],    # ctx slab
    )(x2d, biasmask, p["ln1"], wqkv, p["wo"], p["ln2"], wi, p["wo_ff"])
    return out2d.reshape(B, L, D)


# ---------------- pure-JAX reference for verification ----------------------
def ref_forward(x, mask_add, rel_bias, p):
    def rms(h, w):
        return h * jax.lax.rsqrt(jnp.mean(h * h, -1, keepdims=True) + EPS) * w

    normed = rms(x, p["ln1"][0])
    q = (normed @ p["wq"]).reshape(B, L, H, DH).transpose(0, 2, 1, 3)
    k = (normed @ p["wk"]).reshape(B, L, H, DH).transpose(0, 2, 1, 3)
    v = (normed @ p["wv"]).reshape(B, L, H, DH).transpose(0, 2, 1, 3)
    s = jnp.einsum("bhqd,bhkd->bhqk", q, k)
    s = s + rel_bias[None] + mask_add[:, :, None, :]
    a = jax.nn.softmax(s, axis=-1)
    ctx = jnp.einsum("bhqk,bhkd->bhqd", a, v).transpose(0, 2, 1, 3).reshape(B, L, D)
    h1 = x + ctx @ p["wo"]
    normed2 = rms(h1, p["ln2"][0])
    ff = (gelu_new(normed2 @ p["wi0"]) * (normed2 @ p["wi1"])) @ p["wo_ff"]
    return h1 + ff


if __name__ == "__main__":
    key = jax.random.PRNGKey(0)
    keys = jax.random.split(key, 12)
    init = lambda k, shape, s=0.05: (s * jax.random.normal(k, shape)).astype(jnp.float32)

    params = {
        "ln1": (1.0 + 0.1 * jax.random.normal(keys[0], (1, D))).astype(jnp.float32),
        "ln2": (1.0 + 0.1 * jax.random.normal(keys[1], (1, D))).astype(jnp.float32),
        "wq": init(keys[2], (D, D)),
        "wk": init(keys[3], (D, D)),
        "wv": init(keys[4], (D, D)),
        "wo": init(keys[5], (D, D)),
        "wi0": init(keys[6], (D, F_FF)),
        "wi1": init(keys[7], (D, F_FF)),
        "wo_ff": init(keys[8], (F_FF, D)),
    }
    rel_emb = init(keys[9], (NUM_BUCKETS, H), s=0.5)        # Embedding(num_buckets, n_heads)
    rel_bias = compute_rel_bias(rel_emb, L, L)              # (H, L, L)

    x = jax.random.normal(keys[10], (B, L, D), dtype=jnp.float32)

    # encoder padding mask: batch 1 has its last 2 tokens padded
    pad_mask = jnp.ones((B, L), dtype=jnp.float32).at[1, L - 2:].set(0.0)
    mask_add = ((1.0 - pad_mask) * -1e9).reshape(B, 1, L)   # additive key mask

    out = t5_layer_forward(x, mask_add, rel_bias, params)
    out = jax.block_until_ready(out)

    ref = ref_forward(x, mask_add, rel_bias, params)
    assert out.shape == (B, L, D)
    # tolerance 1e-3 accommodates the EUP approx-reciprocal in the softmax
    assert jnp.allclose(out, ref, atol=1e-3, rtol=1e-3), "mismatch vs reference"
    print("KERNEL_OK")
</pallas_src>

<mosaic_0001>
module attributes {stable_mosaic.version = 11 : i64} {
  func.func @t5_layer_kernel(%arg0: memref<16x32xf32, #tpu.memory_space<vmem>>, %arg1: memref<2x4x8x8xf32, #tpu.memory_space<vmem>>, %arg2: memref<1x32xf32, #tpu.memory_space<vmem>>, %arg3: memref<32x96xf32, #tpu.memory_space<vmem>>, %arg4: memref<32x32xf32, #tpu.memory_space<vmem>>, %arg5: memref<1x32xf32, #tpu.memory_space<vmem>>, %arg6: memref<32x128xf32, #tpu.memory_space<vmem>>, %arg7: memref<64x32xf32, #tpu.memory_space<vmem>>, %arg8: memref<16x32xf32, #tpu.memory_space<vmem>>, %arg9: memref<16x32xf32, #tpu.memory_space<vmem>>) attributes {dimension_semantics = [], scalar_prefetch = 0 : i64, scratch_operands = 1 : i64, tpu.core_type = #tpu.core_type<tc>} {
    %c0 = arith.constant 0 : index
    %c0_0 = arith.constant 0 : index
    %0 = vector.load %arg0[%c0, %c0_0] : memref<16x32xf32, #tpu.memory_space<vmem>>, vector<16x32xf32>
    %1 = arith.mulf %0, %0 : vector<16x32xf32>
    %cst = arith.constant dense<0.000000e+00> : vector<16xf32>
    %2 = vector.multi_reduction <add>, %1, %cst [1] : vector<16x32xf32> to vector<16xf32>
    %3 = vector.shape_cast %2 : vector<16xf32> to vector<16x1xf32>
    %cst_1 = arith.constant 3.200000e+01 : f32
    %4 = vector.broadcast %cst_1 : f32 to vector<16x1xf32>
    %5 = arith.divf %3, %4 : vector<16x1xf32>
    %cst_2 = arith.constant 9.99999997E-7 : f32
    %6 = vector.broadcast %cst_2 : f32 to vector<16x1xf32>
    %7 = arith.addf %5, %6 : vector<16x1xf32>
    %8 = math.rsqrt %7 : vector<16x1xf32>
    %9 = vector.broadcast %8 : vector<16x1xf32> to vector<16x32xf32>
    %10 = arith.mulf %0, %9 : vector<16x32xf32>
    %c0_3 = arith.constant 0 : index
    %c0_4 = arith.constant 0 : index
    %11 = vector.load %arg2[%c0_3, %c0_4] : memref<1x32xf32, #tpu.memory_space<vmem>>, vector<1x32xf32>
    %12 = vector.broadcast %11 : vector<1x32xf32> to vector<16x32xf32>
    %13 = arith.mulf %10, %12 : vector<16x32xf32>
    %c0_5 = arith.constant 0 : index
    %c0_6 = arith.constant 0 : index
    %14 = vector.load %arg3[%c0_5, %c0_6] : memref<32x96xf32, #tpu.memory_space<vmem>>, vector<32x96xf32>
    %cst_7 = arith.constant dense<0.000000e+00> : vector<16x96xf32>
    %15 = tpu.matmul %13, %14, %cst_7 {dimension_numbers = #tpu.dot_dimension_numbers<[1], [0], [0], [1], [0, 0, 1, 1], [], []>} : vector<16x32xf32>, vector<32x96xf32>, vector<16x96xf32> -> vector<16x96xf32>
    %16 = vector.extract_strided_slice %15 {offsets = [0, 0], sizes = [8, 8], strides = [1, 1]} : vector<16x96xf32> to vector<8x8xf32>
    %17 = vector.extract_strided_slice %15 {offsets = [0, 32], sizes = [8, 8], strides = [1, 1]} : vector<16x96xf32> to vector<8x8xf32>
    %18 = vector.extract_strided_slice %15 {offsets = [0, 64], sizes = [8, 8], strides = [1, 1]} : vector<16x96xf32> to vector<8x8xf32>
    %cst_8 = arith.constant dense<0.000000e+00> : vector<8x8xf32>
    %19 = tpu.matmul %16, %17, %cst_8 {dimension_numbers = #tpu.dot_dimension_numbers<[1], [1], [0], [0], [0, 0, 1, 0], [], []>} : vector<8x8xf32>, vector<8x8xf32>, vector<8x8xf32> -> vector<8x8xf32>
    %c0_9 = arith.constant 0 : index
    %c0_10 = arith.constant 0 : index
    %c0_11 = arith.constant 0 : index
    %c0_12 = arith.constant 0 : index
    %20 = vector.load %arg1[%c0_9, %c0_10, %c0_11, %c0_12] : memref<2x4x8x8xf32, #tpu.memory_space<vmem>>, vector<1x1x8x8xf32>
    %21 = vector.shape_cast %20 : vector<1x1x8x8xf32> to vector<8x8xf32>
    %22 = arith.addf %19, %21 : vector<8x8xf32>
    %cst_13 = arith.constant dense<0xFF800000> : vector<8xf32>
    %23 = vector.multi_reduction <maximumf>, %22, %cst_13 [1] : vector<8x8xf32> to vector<8xf32>
    %24 = vector.shape_cast %23 : vector<8xf32> to vector<8x1xf32>
    %25 = vector.broadcast %24 : vector<8x1xf32> to vector<8x8xf32>
    %26 = arith.subf %22, %25 : vector<8x8xf32>
    %27 = math.exp %26 : vector<8x8xf32>
    %cst_14 = arith.constant dense<0.000000e+00> : vector<8x8xf32>
    %28 = tpu.matmul %27, %18, %cst_14 {dimension_numbers = #tpu.dot_dimension_numbers<[1], [0], [0], [1], [0, 0, 1, 1], [], []>} : vector<8x8xf32>, vector<8x8xf32>, vector<8x8xf32> -> vector<8x8xf32>
    %cst_15 = arith.constant dense<0.000000e+00> : vector<8xf32>
    %29 = vector.multi_reduction <add>, %27, %cst_15 [1] : vector<8x8xf32> to vector<8xf32>
    %30 = vector.shape_cast %29 : vector<8xf32> to vector<8x1xf32>
    %31 = tpu.reciprocal %30 {approx = true} : vector<8x1xf32> -> vector<8x1xf32>
    %32 = vector.broadcast %31 : vector<8x1xf32> to vector<8x8xf32>
    %33 = arith.mulf %28, %32 : vector<8x8xf32>
    %c0_16 = arith.constant 0 : index
    %c0_17 = arith.constant 0 : index
    %34 = vector.load %arg9[%c0_16, %c0_17] : memref<16x32xf32, #tpu.memory_space<vmem>>, vector<8x8xf32>
    tpu.vector_store %arg9[%c0_16, %c0_17], %33 {strides = array<i32>} : memref<16x32xf32, #tpu.memory_space<vmem>>, vector<8x8xf32>,
    %35 = vector.extract_strided_slice %15 {offsets = [0, 8], sizes = [8, 8], strides = [1, 1]} : vector<16x96xf32> to vector<8x8xf32>
    %36 = vector.extract_strided_slice %15 {offsets = [0, 40], sizes = [8, 8], strides = [1, 1]} : vector<16x96xf32> to vector<8x8xf32>
    %37 = vector.extract_strided_slice %15 {offsets = [0, 72], sizes = [8, 8], strides = [1, 1]} : vector<16x96xf32> to vector<8x8xf32>
    %cst_18 = arith.constant dense<0.000000e+00> : vector<8x8xf32>
    %38 = tpu.matmul %35, %36, %cst_18 {dimension_numbers = #tpu.dot_dimension_numbers<[1], [1], [0], [0], [0, 0, 1, 0], [], []>} : vector<8x8xf32>, vector<8x8xf32>, vector<8x8xf32> -> vector<8x8xf32>
    %c0_19 = arith.constant 0 : index
    %c1 = arith.constant 1 : index
    %c0_20 = arith.constant 0 : index
    %c0_21 = arith.constant 0 : index
    %39 = vector.load %arg1[%c0_19, %c1, %c0_20, %c0_21] : memref<2x4x8x8xf32, #tpu.memory_space<vmem>>, vector<1x1x8x8xf32>
    %40 = vector.shape_cast %39 : vector<1x1x8x8xf32> to vector<8x8xf32>
    %41 = arith.addf %38, %40 : vector<8x8xf32>
    %cst_22 = arith.constant dense<0xFF800000> : vector<8xf32>
    %42 = vector.multi_reduction <maximumf>, %41, %cst_22 [1] : vector<8x8xf32> to vector<8xf32>
    %43 = vector.shape_cast %42 : vector<8xf32> to vector<8x1xf32>
    %44 = vector.broadcast %43 : vector<8x1xf32> to vector<8x8xf32>
    %45 = arith.subf %41, %44 : vector<8x8xf32>
    %46 = math.exp %45 : vector<8x8xf32>
    %cst_23 = arith.constant dense<0.000000e+00> : vector<8x8xf32>
    %47 = tpu.matmul %46, %37, %cst_23 {dimension_numbers = #tpu.dot_dimension_numbers<[1], [0], [0], [1], [0, 0, 1, 1], [], []>} : vector<8x8xf32>, vector<8x8xf32>, vector<8x8xf32> -> vector<8x8xf32>
    %cst_24 = arith.constant dense<0.000000e+00> : vector<8xf32>
    %48 = vector.multi_reduction <add>, %46, %cst_24 [1] : vector<8x8xf32> to vector<8xf32>
    %49 = vector.shape_cast %48 : vector<8xf32> to vector<8x1xf32>
    %50 = tpu.reciprocal %49 {approx = true} : vector<8x1xf32> -> vector<8x1xf32>
    %51 = vector.broadcast %50 : vector<8x1xf32> to vector<8x8xf32>
    %52 = arith.mulf %47, %51 : vector<8x8xf32>
    %c0_25 = arith.constant 0 : index
    %c8 = arith.constant 8 : index
    %53 = vector.load %arg9[%c0_25, %c8] : memref<16x32xf32, #tpu.memory_space<vmem>>, vector<8x8xf32>
    tpu.vector_store %arg9[%c0_25, %c8], %52 {strides = array<i32>} : memref<16x32xf32, #tpu.memory_space<vmem>>, vector<8x8xf32>,
    %54 = vector.extract_strided_slice %15 {offsets = [0, 16], sizes = [8, 8], strides = [1, 1]} : vector<16x96xf32> to vector<8x8xf32>
    %55 = vector.extract_strided_slice %15 {offsets = [0, 48], sizes = [8, 8], strides = [1, 1]} : vector<16x96xf32> to vector<8x8xf32>
    %56 = vector.extract_strided_slice %15 {offsets = [0, 80], sizes = [8, 8], strides = [1, 1]} : vector<16x96xf32> to vector<8x8xf32>
    %cst_26 = arith.constant dense<0.000000e+00> : vector<8x8xf32>
    %57 = tpu.matmul %54, %55, %cst_26 {dimension_numbers = #tpu.dot_dimension_numbers<[1], [1], [0], [0], [0, 0, 1, 0], [], []>} : vector<8x8xf32>, vector<8x8xf32>, vector<8x8xf32> -> vector<8x8xf32>
    %c0_27 = arith.constant 0 : index
    %c2 = arith.constant 2 : index
    %c0_28 = arith.constant 0 : index
    %c0_29 = arith.constant 0 : index
    %58 = vector.load %arg1[%c0_27, %c2, %c0_28, %c0_29] : memref<2x4x8x8xf32, #tpu.memory_space<vmem>>, vector<1x1x8x8xf32>
    %59 = vector.shape_cast %58 : vector<1x1x8x8xf32> to vector<8x8xf32>
    %60 = arith.addf %57, %59 : vector<8x8xf32>
    %cst_30 = arith.constant dense<0xFF800000> : vector<8xf32>
    %61 = vector.multi_reduction <maximumf>, %60, %cst_30 [1] : vector<8x8xf32> to vector<8xf32>
    %62 = vector.shape_cast %61 : vector<8xf32> to vector<8x1xf32>
    %63 = vector.broadcast %62 : vector<8x1xf32> to vector<8x8xf32>
    %64 = arith.subf %60, %63 : vector<8x8xf32>
    %65 = math.exp %64 : vector<8x8xf32>
    %cst_31 = arith.constant dense<0.000000e+00> : vector<8x8xf32>
    %66 = tpu.matmul %65, %56, %cst_31 {dimension_numbers = #tpu.dot_dimension_numbers<[1], [0], [0], [1], [0, 0, 1, 1], [], []>} : vector<8x8xf32>, vector<8x8xf32>, vector<8x8xf32> -> vector<8x8xf32>
    %cst_32 = arith.constant dense<0.000000e+00> : vector<8xf32>
    %67 = vector.multi_reduction <add>, %65, %cst_32 [1] : vector<8x8xf32> to vector<8xf32>
    %68 = vector.shape_cast %67 : vector<8xf32> to vector<8x1xf32>
    %69 = tpu.reciprocal %68 {approx = true} : vector<8x1xf32> -> vector<8x1xf32>
    %70 = vector.broadcast %69 : vector<8x1xf32> to vector<8x8xf32>
    %71 = arith.mulf %66, %70 : vector<8x8xf32>
    %c0_33 = arith.constant 0 : index
    %c16 = arith.constant 16 : index
    %72 = vector.load %arg9[%c0_33, %c16] : memref<16x32xf32, #tpu.memory_space<vmem>>, vector<8x8xf32>
    tpu.vector_store %arg9[%c0_33, %c16], %71 {strides = array<i32>} : memref<16x32xf32, #tpu.memory_space<vmem>>, vector<8x8xf32>,
    %73 = vector.extract_strided_slice %15 {offsets = [0, 24], sizes = [8, 8], strides = [1, 1]} : vector<16x96xf32> to vector<8x8xf32>
    %74 = vector.extract_strided_slice %15 {offsets = [0, 56], sizes = [8, 8], strides = [1, 1]} : vector<16x96xf32> to vector<8x8xf32>
    %75 = vector.extract_strided_slice %15 {offsets = [0, 88], sizes = [8, 8], strides = [1, 1]} : vector<16x96xf32> to vector<8x8xf32>
    %cst_34 = arith.constant dense<0.000000e+00> : vector<8x8xf32>
    %76 = tpu.matmul %73, %74, %cst_34 {dimension_numbers = #tpu.dot_dimension_numbers<[1], [1], [0], [0], [0, 0, 1, 0], [], []>} : vector<8x8xf32>, vector<8x8xf32>, vector<8x8xf32> -> vector<8x8xf32>
    %c0_35 = arith.constant 0 : index
    %c3 = arith.constant 3 : index
    %c0_36 = arith.constant 0 : index
    %c0_37 = arith.constant 0 : index
    %77 = vector.load %arg1[%c0_35, %c3, %c0_36, %c0_37] : memref<2x4x8x8xf32, #tpu.memory_space<vmem>>, vector<1x1x8x8xf32>
    %78 = vector.shape_cast %77 : vector<1x1x8x8xf32> to vector<8x8xf32>
    %79 = arith.addf %76, %78 : vector<8x8xf32>
    %cst_38 = arith.constant dense<0xFF800000> : vector<8xf32>
    %80 = vector.multi_reduction <maximumf>, %79, %cst_38 [1] : vector<8x8xf32> to vector<8xf32>
    %81 = vector.shape_cast %80 : vector<8xf32> to vector<8x1xf32>
    %82 = vector.broadcast %81 : vector<8x1xf32> to vector<8x8xf32>
    %83 = arith.subf %79, %82 : vector<8x8xf32>
    %84 = math.exp %83 : vector<8x8xf32>
    %cst_39 = arith.constant dense<0.000000e+00> : vector<8x8xf32>
    %85 = tpu.matmul %84, %75, %cst_39 {dimension_numbers = #tpu.dot_dimension_numbers<[1], [0], [0], [1], [0, 0, 1, 1], [], []>} : vector<8x8xf32>, vector<8x8xf32>, vector<8x8xf32> -> vector<8x8xf32>
    %cst_40 = arith.constant dense<0.000000e+00> : vector<8xf32>
    %86 = vector.multi_reduction <add>, %84, %cst_40 [1] : vector<8x8xf32> to vector<8xf32>
    %87 = vector.shape_cast %86 : vector<8xf32> to vector<8x1xf32>
    %88 = tpu.reciprocal %87 {approx = true} : vector<8x1xf32> -> vector<8x1xf32>
    %89 = vector.broadcast %88 : vector<8x1xf32> to vector<8x8xf32>
    %90 = arith.mulf %85, %89 : vector<8x8xf32>
    %c0_41 = arith.constant 0 : index
    %c24 = arith.constant 24 : index
    %91 = vector.load %arg9[%c0_41, %c24] : memref<16x32xf32, #tpu.memory_space<vmem>>, vector<8x8xf32>
    tpu.vector_store %arg9[%c0_41, %c24], %90 {strides = array<i32>} : memref<16x32xf32, #tpu.memory_space<vmem>>, vector<8x8xf32>,
    %92 = vector.extract_strided_slice %15 {offsets = [8, 0], sizes = [8, 8], strides = [1, 1]} : vector<16x96xf32> to vector<8x8xf32>
    %93 = vector.extract_strided_slice %15 {offsets = [8, 32], sizes = [8, 8], strides = [1, 1]} : vector<16x96xf32> to vector<8x8xf32>
    %94 = vector.extract_strided_slice %15 {offsets = [8, 64], sizes = [8, 8], strides = [1, 1]} : vector<16x96xf32> to vector<8x8xf32>
    %cst_42 = arith.constant dense<0.000000e+00> : vector<8x8xf32>
    %95 = tpu.matmul %92, %93, %cst_42 {dimension_numbers = #tpu.dot_dimension_numbers<[1], [1], [0], [0], [0, 0, 1, 0], [], []>} : vector<8x8xf32>, vector<8x8xf32>, vector<8x8xf32> -> vector<8x8xf32>
    %c1_43 = arith.constant 1 : index
    %c0_44 = arith.constant 0 : index
    %c0_45 = arith.constant 0 : index
    %c0_46 = arith.constant 0 : index
    %96 = vector.load %arg1[%c1_43, %c0_44, %c0_45, %c0_46] : memref<2x4x8x8xf32, #tpu.memory_space<vmem>>, vector<1x1x8x8xf32>
    %97 = vector.shape_cast %96 : vector<1x1x8x8xf32> to vector<8x8xf32>
    %98 = arith.addf %95, %97 : vector<8x8xf32>
    %cst_47 = arith.constant dense<0xFF800000> : vector<8xf32>
    %99 = vector.multi_reduction <maximumf>, %98, %cst_47 [1] : vector<8x8xf32> to vector<8xf32>
    %100 = vector.shape_cast %99 : vector<8xf32> to vector<8x1xf32>
    %101 = vector.broadcast %100 : vector<8x1xf32> to vector<8x8xf32>
    %102 = arith.subf %98, %101 : vector<8x8xf32>
    %103 = math.exp %102 : vector<8x8xf32>
    %cst_48 = arith.constant dense<0.000000e+00> : vector<8x8xf32>
    %104 = tpu.matmul %103, %94, %cst_48 {dimension_numbers = #tpu.dot_dimension_numbers<[1], [0], [0], [1], [0, 0, 1, 1], [], []>} : vector<8x8xf32>, vector<8x8xf32>, vector<8x8xf32> -> vector<8x8xf32>
    %cst_49 = arith.constant dense<0.000000e+00> : vector<8xf32>
    %105 = vector.multi_reduction <add>, %103, %cst_49 [1] : vector<8x8xf32> to vector<8xf32>
    %106 = vector.shape_cast %105 : vector<8xf32> to vector<8x1xf32>
    %107 = tpu.reciprocal %106 {approx = true} : vector<8x1xf32> -> vector<8x1xf32>
    %108 = vector.broadcast %107 : vector<8x1xf32> to vector<8x8xf32>
    %109 = arith.mulf %104, %108 : vector<8x8xf32>
    %c8_50 = arith.constant 8 : index
    %c0_51 = arith.constant 0 : index
    %110 = vector.load %arg9[%c8_50, %c0_51] : memref<16x32xf32, #tpu.memory_space<vmem>>, vector<8x8xf32>
    tpu.vector_store %arg9[%c8_50, %c0_51], %109 {strides = array<i32>} : memref<16x32xf32, #tpu.memory_space<vmem>>, vector<8x8xf32>,
    %111 = vector.extract_strided_slice %15 {offsets = [8, 8], sizes = [8, 8], strides = [1, 1]} : vector<16x96xf32> to vector<8x8xf32>
    %112 = vector.extract_strided_slice %15 {offsets = [8, 40], sizes = [8, 8], strides = [1, 1]} : vector<16x96xf32> to vector<8x8xf32>
    %113 = vector.extract_strided_slice %15 {offsets = [8, 72], sizes = [8, 8], strides = [1, 1]} : vector<16x96xf32> to vector<8x8xf32>
    %cst_52 = arith.constant dense<0.000000e+00> : vector<8x8xf32>
    %114 = tpu.matmul %111, %112, %cst_52 {dimension_numbers = #tpu.dot_dimension_numbers<[1], [1], [0], [0], [0, 0, 1, 0], [], []>} : vector<8x8xf32>, vector<8x8xf32>, vector<8x8xf32> -> vector<8x8xf32>
    %c1_53 = arith.constant 1 : index
    %c1_54 = arith.constant 1 : index
    %c0_55 = arith.constant 0 : index
    %c0_56 = arith.constant 0 : index
    %115 = vector.load %arg1[%c1_53, %c1_54, %c0_55, %c0_56] : memref<2x4x8x8xf32, #tpu.memory_space<vmem>>, vector<1x1x8x8xf32>
    %116 = vector.shape_cast %115 : vector<1x1x8x8xf32> to vector<8x8xf32>
    %117 = arith.addf %114, %116 : vector<8x8xf32>
    %cst_57 = arith.constant dense<0xFF800000> : vector<8xf32>
    %118 = vector.multi_reduction <maximumf>, %117, %cst_57 [1] : vector<8x8xf32> to vector<8xf32>
    %119 = vector.shape_cast %118 : vector<8xf32> to vector<8x1xf32>
    %120 = vector.broadcast %119 : vector<8x1xf32> to vector<8x8xf32>
    %121 = arith.subf %117, %120 : vector<8x8xf32>
    %122 = math.exp %121 : vector<8x8xf32>
    %cst_58 = arith.constant dense<0.000000e+00> : vector<8x8xf32>
    %123 = tpu.matmul %122, %113, %cst_58 {dimension_numbers = #tpu.dot_dimension_numbers<[1], [0], [0], [1], [0, 0, 1, 1], [], []>} : vector<8x8xf32>, vector<8x8xf32>, vector<8x8xf32> -> vector<8x8xf32>
    %cst_59 = arith.constant dense<0.000000e+00> : vector<8xf32>
    %124 = vector.multi_reduction <add>, %122, %cst_59 [1] : vector<8x8xf32> to vector<8xf32>
    %125 = vector.shape_cast %124 : vector<8xf32> to vector<8x1xf32>
    %126 = tpu.reciprocal %125 {approx = true} : vector<8x1xf32> -> vector<8x1xf32>
    %127 = vector.broadcast %126 : vector<8x1xf32> to vector<8x8xf32>
    %128 = arith.mulf %123, %127 : vector<8x8xf32>
    %c8_60 = arith.constant 8 : index
    %c8_61 = arith.constant 8 : index
    %129 = vector.load %arg9[%c8_60, %c8_61] : memref<16x32xf32, #tpu.memory_space<vmem>>, vector<8x8xf32>
    tpu.vector_store %arg9[%c8_60, %c8_61], %128 {strides = array<i32>} : memref<16x32xf32, #tpu.memory_space<vmem>>, vector<8x8xf32>,
    %130 = vector.extract_strided_slice %15 {offsets = [8, 16], sizes = [8, 8], strides = [1, 1]} : vector<16x96xf32> to vector<8x8xf32>
    %131 = vector.extract_strided_slice %15 {offsets = [8, 48], sizes = [8, 8], strides = [1, 1]} : vector<16x96xf32> to vector<8x8xf32>
    %132 = vector.extract_strided_slice %15 {offsets = [8, 80], sizes = [8, 8], strides = [1, 1]} : vector<16x96xf32> to vector<8x8xf32>
    %cst_62 = arith.constant dense<0.000000e+00> : vector<8x8xf32>
    %133 = tpu.matmul %130, %131, %cst_62 {dimension_numbers = #tpu.dot_dimension_numbers<[1], [1], [0], [0], [0, 0, 1, 0], [], []>} : vector<8x8xf32>, vector<8x8xf32>, vector<8x8xf32> -> vector<8x8xf32>
    %c1_63 = arith.constant 1 : index
    %c2_64 = arith.constant 2 : index
    %c0_65 = arith.constant 0 : index
    %c0_66 = arith.constant 0 : index
    %134 = vector.load %arg1[%c1_63, %c2_64, %c0_65, %c0_66] : memref<2x4x8x8xf32, #tpu.memory_space<vmem>>, vector<1x1x8x8xf32>
    %135 = vector.shape_cast %134 : vector<1x1x8x8xf32> to vector<8x8xf32>
    %136 = arith.addf %133, %135 : vector<8x8xf32>
    %cst_67 = arith.constant dense<0xFF800000> : vector<8xf32>
    %137 = vector.multi_reduction <maximumf>, %136, %cst_67 [1] : vector<8x8xf32> to vector<8xf32>
    %138 = vector.shape_cast %137 : vector<8xf32> to vector<8x1xf32>
    %139 = vector.broadcast %138 : vector<8x1xf32> to vector<8x8xf32>
    %140 = arith.subf %136, %139 : vector<8x8xf32>
    %141 = math.exp %140 : vector<8x8xf32>
    %cst_68 = arith.constant dense<0.000000e+00> : vector<8x8xf32>
    %142 = tpu.matmul %141, %132, %cst_68 {dimension_numbers = #tpu.dot_dimension_numbers<[1], [0], [0], [1], [0, 0, 1, 1], [], []>} : vector<8x8xf32>, vector<8x8xf32>, vector<8x8xf32> -> vector<8x8xf32>
    %cst_69 = arith.constant dense<0.000000e+00> : vector<8xf32>
    %143 = vector.multi_reduction <add>, %141, %cst_69 [1] : vector<8x8xf32> to vector<8xf32>
    %144 = vector.shape_cast %143 : vector<8xf32> to vector<8x1xf32>
    %145 = tpu.reciprocal %144 {approx = true} : vector<8x1xf32> -> vector<8x1xf32>
    %146 = vector.broadcast %145 : vector<8x1xf32> to vector<8x8xf32>
    %147 = arith.mulf %142, %146 : vector<8x8xf32>
    %c8_70 = arith.constant 8 : index
    %c16_71 = arith.constant 16 : index
    %148 = vector.load %arg9[%c8_70, %c16_71] : memref<16x32xf32, #tpu.memory_space<vmem>>, vector<8x8xf32>
    tpu.vector_store %arg9[%c8_70, %c16_71], %147 {strides = array<i32>} : memref<16x32xf32, #tpu.memory_space<vmem>>, vector<8x8xf32>,
    %149 = vector.extract_strided_slice %15 {offsets = [8, 24], sizes = [8, 8], strides = [1, 1]} : vector<16x96xf32> to vector<8x8xf32>
    %150 = vector.extract_strided_slice %15 {offsets = [8, 56], sizes = [8, 8], strides = [1, 1]} : vector<16x96xf32> to vector<8x8xf32>
    %151 = vector.extract_strided_slice %15 {offsets = [8, 88], sizes = [8, 8], strides = [1, 1]} : vector<16x96xf32> to vector<8x8xf32>
    %cst_72 = arith.constant dense<0.000000e+00> : vector<8x8xf32>
    %152 = tpu.matmul %149, %150, %cst_72 {dimension_numbers = #tpu.dot_dimension_numbers<[1], [1], [0], [0], [0, 0, 1, 0], [], []>} : vector<8x8xf32>, vector<8x8xf32>, vector<8x8xf32> -> vector<8x8xf32>
    %c1_73 = arith.constant 1 : index
    %c3_74 = arith.constant 3 : index
    %c0_75 = arith.constant 0 : index
    %c0_76 = arith.constant 0 : index
    %153 = vector.load %arg1[%c1_73, %c3_74, %c0_75, %c0_76] : memref<2x4x8x8xf32, #tpu.memory_space<vmem>>, vector<1x1x8x8xf32>
    %154 = vector.shape_cast %153 : vector<1x1x8x8xf32> to vector<8x8xf32>
    %155 = arith.addf %152, %154 : vector<8x8xf32>
    %cst_77 = arith.constant dense<0xFF800000> : vector<8xf32>
    %156 = vector.multi_reduction <maximumf>, %155, %cst_77 [1] : vector<8x8xf32> to vector<8xf32>
    %157 = vector.shape_cast %156 : vector<8xf32> to vector<8x1xf32>
    %158 = vector.broadcast %157 : vector<8x1xf32> to vector<8x8xf32>
    %159 = arith.subf %155, %158 : vector<8x8xf32>
    %160 = math.exp %159 : vector<8x8xf32>
    %cst_78 = arith.constant dense<0.000000e+00> : vector<8x8xf32>
    %161 = tpu.matmul %160, %151, %cst_78 {dimension_numbers = #tpu.dot_dimension_numbers<[1], [0], [0], [1], [0, 0, 1, 1], [], []>} : vector<8x8xf32>, vector<8x8xf32>, vector<8x8xf32> -> vector<8x8xf32>
    %cst_79 = arith.constant dense<0.000000e+00> : vector<8xf32>
    %162 = vector.multi_reduction <add>, %160, %cst_79 [1] : vector<8x8xf32> to vector<8xf32>
    %163 = vector.shape_cast %162 : vector<8xf32> to vector<8x1xf32>
    %164 = tpu.reciprocal %163 {approx = true} : vector<8x1xf32> -> vector<8x1xf32>
    %165 = vector.broadcast %164 : vector<8x1xf32> to vector<8x8xf32>
    %166 = arith.mulf %161, %165 : vector<8x8xf32>
    %c8_80 = arith.constant 8 : index
    %c24_81 = arith.constant 24 : index
    %167 = vector.load %arg9[%c8_80, %c24_81] : memref<16x32xf32, #tpu.memory_space<vmem>>, vector<8x8xf32>
    tpu.vector_store %arg9[%c8_80, %c24_81], %166 {strides = array<i32>} : memref<16x32xf32, #tpu.memory_space<vmem>>, vector<8x8xf32>,
    %c0_82 = arith.constant 0 : index
    %c0_83 = arith.constant 0 : index
    %168 = vector.load %arg9[%c0_82, %c0_83] : memref<16x32xf32, #tpu.memory_space<vmem>>, vector<16x32xf32>
    %c0_84 = arith.constant 0 : index
    %c0_85 = arith.constant 0 : index
    %169 = vector.load %arg4[%c0_84, %c0_85] : memref<32x32xf32, #tpu.memory_space<vmem>>, vector<32x32xf32>
    %cst_86 = arith.constant dense<0.000000e+00> : vector<16x32xf32>
    %170 = tpu.matmul %168, %169, %cst_86 {dimension_numbers = #tpu.dot_dimension_numbers<[1], [0], [0], [1], [0, 0, 1, 1], [], []>} : vector<16x32xf32>, vector<32x32xf32>, vector<16x32xf32> -> vector<16x32xf32>
    %171 = arith.addf %0, %170 : vector<16x32xf32>
    %172 = arith.mulf %171, %171 : vector<16x32xf32>
    %cst_87 = arith.constant dense<0.000000e+00> : vector<16xf32>
    %173 = vector.multi_reduction <add>, %172, %cst_87 [1] : vector<16x32xf32> to vector<16xf32>
    %174 = vector.shape_cast %173 : vector<16xf32> to vector<16x1xf32>
    %cst_88 = arith.constant 3.200000e+01 : f32
    %175 = vector.broadcast %cst_88 : f32 to vector<16x1xf32>
    %176 = arith.divf %174, %175 : vector<16x1xf32>
    %cst_89 = arith.constant 9.99999997E-7 : f32
    %177 = vector.broadcast %cst_89 : f32 to vector<16x1xf32>
    %178 = arith.addf %176, %177 : vector<16x1xf32>
    %179 = math.rsqrt %178 : vector<16x1xf32>
    %180 = vector.broadcast %179 : vector<16x1xf32> to vector<16x32xf32>
    %181 = arith.mulf %171, %180 : vector<16x32xf32>
    %c0_90 = arith.constant 0 : index
    %c0_91 = arith.constant 0 : index
    %182 = vector.load %arg5[%c0_90, %c0_91] : memref<1x32xf32, #tpu.memory_space<vmem>>, vector<1x32xf32>
    %183 = vector.broadcast %182 : vector<1x32xf32> to vector<16x32xf32>
    %184 = arith.mulf %181, %183 : vector<16x32xf32>
    %c0_92 = arith.constant 0 : index
    %c0_93 = arith.constant 0 : index
    %185 = vector.load %arg6[%c0_92, %c0_93] : memref<32x128xf32, #tpu.memory_space<vmem>>, vector<32x128xf32>
    %cst_94 = arith.constant dense<0.000000e+00> : vector<16x128xf32>
    %186 = tpu.matmul %184, %185, %cst_94 {dimension_numbers = #tpu.dot_dimension_numbers<[1], [0], [0], [1], [0, 0, 1, 1], [], []>} : vector<16x32xf32>, vector<32x128xf32>, vector<16x128xf32> -> vector<16x128xf32>
    %187 = vector.extract_strided_slice %186 {offsets = [0, 0], sizes = [16, 64], strides = [1, 1]} : vector<16x128xf32> to vector<16x64xf32>
    %188 = vector.extract_strided_slice %186 {offsets = [0, 64], sizes = [16, 64], strides = [1, 1]} : vector<16x128xf32> to vector<16x64xf32>
    %cst_95 = arith.constant 5.000000e-01 : f32
    %189 = vector.broadcast %cst_95 : f32 to vector<16x64xf32>
    %190 = arith.mulf %189, %187 : vector<16x64xf32>
    %cst_96 = arith.constant 4.471500e-02 : f32
    %191 = vector.broadcast %cst_96 : f32 to vector<16x64xf32>
    %192 = arith.mulf %191, %187 : vector<16x64xf32>
    %193 = arith.mulf %192, %187 : vector<16x64xf32>
    %194 = arith.mulf %193, %187 : vector<16x64xf32>
    %195 = arith.addf %187, %194 : vector<16x64xf32>
    %cst_97 = arith.constant 0.797884583 : f32
    %196 = vector.broadcast %cst_97 : f32 to vector<16x64xf32>
    %197 = arith.mulf %196, %195 : vector<16x64xf32>
    %198 = math.tanh %197 : vector<16x64xf32>
    %cst_98 = arith.constant 1.000000e+00 : f32
    %199 = vector.broadcast %cst_98 : f32 to vector<16x64xf32>
    %200 = arith.addf %199, %198 : vector<16x64xf32>
    %201 = arith.mulf %190, %200 : vector<16x64xf32>
    %202 = arith.mulf %201, %188 : vector<16x64xf32>
    %c0_99 = arith.constant 0 : index
    %c0_100 = arith.constant 0 : index
    %203 = vector.load %arg7[%c0_99, %c0_100] : memref<64x32xf32, #tpu.memory_space<vmem>>, vector<64x32xf32>
    %cst_101 = arith.constant dense<0.000000e+00> : vector<16x32xf32>
    %204 = tpu.matmul %202, %203, %cst_101 {dimension_numbers = #tpu.dot_dimension_numbers<[1], [0], [0], [1], [0, 0, 1, 1], [], []>} : vector<16x64xf32>, vector<64x32xf32>, vector<16x32xf32> -> vector<16x32xf32>
    %205 = arith.addf %171, %204 : vector<16x32xf32>
    %c0_102 = arith.constant 0 : index
    %c0_103 = arith.constant 0 : index
    %206 = vector.load %arg8[%c0_102, %c0_103] : memref<16x32xf32, #tpu.memory_space<vmem>>, vector<16x32xf32>
    tpu.vector_store %arg8[%c0_102, %c0_103], %205 {strides = array<i32>} : memref<16x32xf32, #tpu.memory_space<vmem>>, vector<16x32xf32>,
    return
  }
}

</mosaic_0001>

<llo_original>
// kernel: tpu_custom_call.1
$region0: #{tpu_custom_call.1}
  #allocation0 [shape = 'u32[]', space=smem, size = 0x4, offset = 0x4, fixed_abs, tag = 'smem constant byte address 0x4 - core index']
  #allocation1 [shape = 'u32[144,128]{1,0:T(1,128)}', space=vmem, size = 0x12000, scoped, tag = 'internal scratch']
  #allocation2 [shape = 'f32[16,32]{1,0:T(8,128)}', space=vmem, size = 0x2000, scoped, tag = 'scratch operand']
  %s0 = inlined_call_operand.hbm [shape: f32[16,32], index: 0, kind: input, shape index: {}]
  %s1 = inlined_call_operand.vmem [shape: f32[2,4,8,8], index: 1, kind: input, shape index: {}]
  %s2 = inlined_call_operand.vmem [shape: f32[1,32], index: 2, kind: input, shape index: {}]
  %s3 = inlined_call_operand.vmem [shape: f32[32,96], index: 3, kind: input, shape index: {}]
  %s4 = inlined_call_operand.hbm [shape: f32[32,32], index: 4, kind: input, shape index: {}]
  %s5 = inlined_call_operand.vmem [shape: f32[1,32], index: 5, kind: input, shape index: {}]
  %s6 = inlined_call_operand.hbm [shape: f32[32,128], index: 6, kind: input, shape index: {}]
  %s7 = inlined_call_operand.vmem [shape: f32[64,32], index: 7, kind: input, shape index: {}]
  %s8 = inlined_call_operand.hbm [shape: f32[16,32], index: 8, kind: output, shape index: {}]
  %s9 = sld [smem:[#allocation0]]
  $region54: #{tpu_custom_call.1} parent=0
    _
  %s11 = ssub.s32 1, %s9
  %s12 = scalar_select 0, %s11, %s9
  $region1: #{tpu_custom_call.1} parent=0
    #allocation3 [shape = 'u8[8192]{0}', space=vmem, size = 0x2000, scoped, tag = 'input window, operand 0, single buffered']
    #allocation4 [shape = 's32[1]{0}', space=sflag, size = 0x4, scoped, tag = 'scoped memory for tpu_custom_call.1']
    #allocation5 [shape = 's32[1]{0}', space=sflag, size = 0x4, scoped, tag = 'scoped memory for tpu_custom_call.1']
    #allocation6 [shape = 'u8[16384]{0}', space=vmem, size = 0x4000, scoped, tag = 'input window, operand 4, single buffered']
    #allocation7 [shape = 's32[1]{0}', space=sflag, size = 0x4, scoped, tag = 'scoped memory for tpu_custom_call.1']
    #allocation8 [shape = 'u8[16384]{0}', space=vmem, size = 0x4000, scoped, tag = 'input window, operand 6, single buffered']
    #allocation9 [shape = 'u8[8192]{0}', space=vmem, size = 0x2000, scoped, tag = 'output window, operand 0, single buffered']
    %13 = vsyncpa [#allocation4], 0
    %14 = vsyncpa [#allocation7], 0
    %15 = vsyncpa [#allocation5], 0
    // Predicated region
    $region2: #{tpu_custom_call.1} parent=1 // pred_check
      _
    $region3: #{tpu_custom_call.1} parent=1 // pred_check_branch
      %17 = sbr.rel (0) target = $region5
    $region4: #{tpu_custom_call.1} parent=1 // pred_region
      %s19 = ssub.s32 256, 256
      %20 = vsyncadd [#allocation4], %s19
      %s21 = sshll.u32 [#allocation3], 4
      %s22 = int_to_ptr.vmem [resolvable:$true] %s21
      %27 = dma.hbm_to_vmem [thread:$0]  %s0, 256, %s22, [#allocation4], 128, 128, 8
    $region5: #{tpu_custom_call.1} parent=1 // pred_fallthru
      _
    // Predicated region
    $region6: #{tpu_custom_call.1} parent=1 // pred_check
      _
    $region7: #{tpu_custom_call.1} parent=1 // pred_check_branch
      %29 = sbr.rel (0) target = $region9
    $region8: #{tpu_custom_call.1} parent=1 // pred_region
      _
    $region9: #{tpu_custom_call.1} parent=1 // pred_fallthru
      _
    // Predicated region
    $region10: #{tpu_custom_call.1} parent=1 // pred_check
      _
    $region11: #{tpu_custom_call.1} parent=1 // pred_check_branch
      %31 = sbr.rel (0) target = $region13
    $region12: #{tpu_custom_call.1} parent=1 // pred_region
      _
    $region13: #{tpu_custom_call.1} parent=1 // pred_fallthru
      _
    // Predicated region
    $region14: #{tpu_custom_call.1} parent=1 // pred_check
      _
    $region15: #{tpu_custom_call.1} parent=1 // pred_check_branch
      %33 = sbr.rel (0) target = $region17
    $region16: #{tpu_custom_call.1} parent=1 // pred_region
      _
    $region17: #{tpu_custom_call.1} parent=1 // pred_fallthru
      _
    // Predicated region
    $region18: #{tpu_custom_call.1} parent=1 // pred_check
      _
    $region19: #{tpu_custom_call.1} parent=1 // pred_check_branch
      %35 = sbr.rel (0) target = $region21
    $region20: #{tpu_custom_call.1} parent=1 // pred_region
      %s37 = ssub.s32 512, 512
      %38 = vsyncadd [#allocation7], %s37
      %s39 = sshll.u32 [#allocation6], 4
      %s40 = int_to_ptr.vmem [resolvable:$true] %s39
      %45 = dma.hbm_to_vmem [thread:$0]  %s4, 512, %s40, [#allocation7], 128, 128, 8
    $region21: #{tpu_custom_call.1} parent=1 // pred_fallthru
      _
    // Predicated region
    $region22: #{tpu_custom_call.1} parent=1 // pred_check
      _
    $region23: #{tpu_custom_call.1} parent=1 // pred_check_branch
      %47 = sbr.rel (0) target = $region25
    $region24: #{tpu_custom_call.1} parent=1 // pred_region
      _
    $region25: #{tpu_custom_call.1} parent=1 // pred_fallthru
      _
    // Predicated region
    $region26: #{tpu_custom_call.1} parent=1 // pred_check
      _
    $region27: #{tpu_custom_call.1} parent=1 // pred_check_branch
      %49 = sbr.rel (0) target = $region29
    $region28: #{tpu_custom_call.1} parent=1 // pred_region
      %s51 = ssub.s32 512, 512
      %52 = vsyncadd [#allocation7], %s51
      %s53 = sshll.u32 [#allocation8], 4
      %s54 = int_to_ptr.vmem [resolvable:$true] %s53
      %59 = dma.hbm_to_vmem [thread:$0]  %s6, 512, %s54, [#allocation7], 128, 128, 8
    $region29: #{tpu_custom_call.1} parent=1 // pred_fallthru
      _
    // Predicated region
    $region30: #{tpu_custom_call.1} parent=1 // pred_check
      _
    $region31: #{tpu_custom_call.1} parent=1 // pred_check_branch
      %61 = sbr.rel (0) target = $region33
    $region32: #{tpu_custom_call.1} parent=1 // pred_region
      _
    $region33: #{tpu_custom_call.1} parent=1 // pred_fallthru
      _
    // Predicated region
    $region34: #{tpu_custom_call.1} parent=1 // pred_check
      _
    $region35: #{tpu_custom_call.1} parent=1 // pred_check_branch
      %63 = sbr.rel (0) target = $region37
    $region36: #{tpu_custom_call.1} parent=1 // pred_region
      %64 = dma.done [#allocation4], 256
    $region37: #{tpu_custom_call.1} parent=1 // pred_fallthru
      _
    // Predicated region
    $region38: #{tpu_custom_call.1} parent=1 // pred_check
      _
    $region39: #{tpu_custom_call.1} parent=1 // pred_check_branch
      %66 = sbr.rel (0) target = $region41
    $region40: #{tpu_custom_call.1} parent=1 // pred_region
      %67 = dma.done [#allocation7], 512
    $region41: #{tpu_custom_call.1} parent=1 // pred_fallthru
      _
    // Predicated region
    $region42: #{tpu_custom_call.1} parent=1 // pred_check
      _
    $region43: #{tpu_custom_call.1} parent=1 // pred_check_branch
      %69 = sbr.rel (0) target = $region45
    $region44: #{tpu_custom_call.1} parent=1 // pred_region
      %70 = dma.done [#allocation7], 512
    $region45: #{tpu_custom_call.1} parent=1 // pred_fallthru
      _
    %v71 = vld [vmem:[#allocation3] sm:$0xff]
    %v72 = vld [vmem:[#allocation3 + $0x8] sm:$0xff]
    %v73 = vmul.f32 %v71, %v71
    %v74 = vmul.f32 %v72, %v72
    %vm75 = vcmask 261120
    %v76 = vsel %vm75, %v73, 0.0
    %77 = vadd.xlane.f32.xlu0 %v76
    %v78 = vpop.xlane.xlu0 %77
    %v79 = vsel %vm75, %v74, 0.0
    %80 = vadd.xlane.f32.xlu0 %v79
    %v81 = vpop.xlane.xlu0 %80
    %v82 = vrcp.pop 32.0
    %v83 = vmul.f32 %v78, %v82
    %v84 = vmul.f32 %v81, %v82
    %v85 = vadd.f32 %v83, 1e-06
    %v86 = vadd.f32 %v84, 1e-06
    %v87 = vrsqrt.pop %v85
    %v88 = vrsqrt.pop %v86
    %v89 = vmul.f32 %v71, %v87
    %v90 = vmul.f32 %v72, %v88
    %v91 = vld [vmem:[%s2] sm:$0x1]
    %v93 = vlaneseq
    %v94 = vshrl.u32 %v93, 7
    %v95 = vsub.s32 0, %v94
    %v96 = vrot.slane %v91, %v95
    %v98 = vmul.f32 %v89, %v96
    %v99 = vmul.f32 %v90, %v96
    %v100 = vld [vmem:[%s3] sm:$0xff]
    %v101 = vld [vmem:[%s3 + $0x8] sm:$0xff]
    %v102 = vld [vmem:[%s3 + $0x10] sm:$0xff]
    %v103 = vld [vmem:[%s3 + $0x18] sm:$0xff]
    %v105 = vsel %vm75, %v98, 0
    %v108 = vsel %vm75, %v99, 0
    %110 = vmatprep.subr.mxu0 0.0
    %111 = vmatpush1.msra.mxu0 %v100
    %112 = vmatprep.subr.mxu0 0.0
    %113 = vmatpush1.msra.mxu0 %v101
    %114 = vmatprep.subr.mxu0 0.0
    %115 = vmatpush1.msra.mxu0 %v102
    %116 = vmatprep.subr.mxu0 0.0
    %117 = vmatpush1.msra.mxu0 %v103
    %118 = vmatprep.subr.mxu0 0.0
    %119 = vmatpush1.msra.mxu0 0.0
    %120 = vmatprep.subr.mxu0 0.0
    %121 = vmatpush1.msra.mxu0 0.0
    %122 = vmatprep.subr.mxu0 0.0
    %123 = vmatpush1.msra.mxu0 0.0
    %124 = vmatprep.subr.mxu0 0.0
    %125 = vmatpush1.msra.mxu0 0.0
    %126 = vmatprep.subr.mxu0 0.0
    %127 = vmatpush1.msra.mxu0 0.0
    %128 = vmatprep.subr.mxu0 0.0
    %129 = vmatpush1.msra.mxu0 0.0
    %130 = vmatprep.subr.mxu0 0.0
    %131 = vmatpush1.msra.mxu0 0.0
    %132 = vmatprep.subr.mxu0 0.0
    %133 = vmatpush1.msra.mxu0 0.0
    %134 = vmatprep.subr.mxu0 0.0
    %135 = vmatpush1.msra.mxu0 0.0
    %136 = vmatprep.subr.mxu0 0.0
    %137 = vmatpush1.msra.mxu0 0.0
    %138 = vmatprep.subr.mxu0 0.0
    %139 = vmatpush1.msra.mxu0 0.0
    %140 = vmatprep.subr.mxu0 0.0
    %141 = vmatpush1.msra.mxu0 0.0
    %142 = vmatprep.subr.mxu0 0.0
    %143 = vmatpush1.msra.mxu0 0.0
    %144 = vmatprep.subr.mxu0 0.0
    %145 = vmatpush1.msra.mxu0 0.0
    %146 = vmatprep.subr.mxu0 0.0
    %147 = vmatpush1.msra.mxu0 0.0
    %148 = vmatprep.subr.mxu0 0.0
    %149 = vmatpush1.msra.mxu0 0.0
    %150 = vmatprep.subr.mxu0 0.0
    %151 = vmatpush1.msra.mxu0 0.0
    %152 = vmatprep.subr.mxu0 0.0
    %153 = vmatpush1.msra.mxu0 0.0
    %154 = vmatprep.subr.mxu0 0.0
    %155 = vmatpush1.msra.mxu0 0.0
    %156 = vmatprep.subr.mxu0 0.0
    %157 = vmatpush1.msra.mxu0 0.0
    %158 = vmatprep.subr.mxu0 0.0
    %159 = vmatpush1.msra.mxu0 0.0
    %160 = vmatprep.subr.mxu0 0.0
    %161 = vmatpush1.msra.mxu0 0.0
    %162 = vmatprep.subr.mxu0 0.0
    %163 = vmatpush1.msra.mxu0 0.0
    %164 = vmatprep.subr.mxu0 0.0
    %165 = vmatpush1.msra.mxu0 0.0
    %166 = vmatprep.subr.mxu0 0.0
    %167 = vmatpush1.msra.mxu0 0.0
    %168 = vmatprep.subr.mxu0 0.0
    %169 = vmatpush1.msra.mxu0 0.0
    %170 = vmatprep.subr.mxu0 0.0
    %171 = vmatpush1.msra.mxu0 0.0
    %172 = vmatprep.subr.mxu0 0.0
    %173 = vmatpush1.msra.mxu0 0.0
    %174 = vmatprep.mubr.f32.mxu0 0.0
    %175 = vmatmul.mubr.f32.gmra.mrb[0].mxu0 %v105
    %v176 = vpop.f32.mrb[0].mxu0
    %v177 = vadd.f32 0.0, %v176
    %v178 = vpop.f32.mrb[0].mxu0
    %179 = vmatprep.mubr.f32.mxu0 0.0
    %180 = vmatmul.mubr.f32.gmra.mrb[0].mxu0 %v108
    %v181 = vpop.f32.mrb[0].mxu0
    %v182 = vadd.f32 0.0, %v181
    %v183 = vpop.f32.mrb[0].mxu0
    %184 = vdwg.mxu0
    %v185 = vld [vmem:[%s1] sm:$0xff]
    %187 = vrot.lane.b32.xlu0 %v177, 96
    %v188 = vpop.permute.xlu0 %187
    %vm189 = vcmask 64512
    %v190 = vsel %vm189, %v177, 0
    %v192 = vsel %vm189, %v188, 0
    %194 = vmatprep.subr.mxu0 0.0
    %195 = vmatpush1.xpose.msra.mxu0 %v192
    %196 = vmatprep.subr.mxu0 0.0
    %197 = vmatpush1.xpose.msra.mxu0 0.0
    %198 = vmatprep.subr.mxu0 0.0
    %199 = vmatpush1.xpose.msra.mxu0 0.0
    %200 = vmatprep.subr.mxu0 0.0
    %201 = vmatpush1.xpose.msra.mxu0 0.0
    %202 = vmatprep.subr.mxu0 0.0
    %203 = vmatpush1.xpose.msra.mxu0 0.0
    %204 = vmatprep.subr.mxu0 0.0
    %205 = vmatpush1.xpose.msra.mxu0 0.0
    %206 = vmatprep.subr.mxu0 0.0
    %207 = vmatpush1.xpose.msra.mxu0 0.0
    %208 = vmatprep.subr.mxu0 0.0
    %209 = vmatpush1.xpose.msra.mxu0 0.0
    %210 = vmatprep.subr.mxu0 0.0
    %211 = vmatpush1.xpose.msra.mxu0 0.0
    %212 = vmatprep.subr.mxu0 0.0
    %213 = vmatpush1.xpose.msra.mxu0 0.0
    %214 = vmatprep.subr.mxu0 0.0
    %215 = vmatpush1.xpose.msra.mxu0 0.0
    %216 = vmatprep.subr.mxu0 0.0
    %217 = vmatpush1.xpose.msra.mxu0 0.0
    %218 = vmatprep.subr.mxu0 0.0
    %219 = vmatpush1.xpose.msra.mxu0 0.0
    %220 = vmatprep.subr.mxu0 0.0
    %221 = vmatpush1.xpose.msra.mxu0 0.0
    %222 = vmatprep.subr.mxu0 0.0
    %223 = vmatpush1.xpose.msra.mxu0 0.0
    %224 = vmatprep.subr.mxu0 0.0
    %225 = vmatpush1.xpose.msra.mxu0 0.0
    %226 = vmatprep.subr.mxu0 0.0
    %227 = vmatpush1.xpose.msra.mxu0 0.0
    %228 = vmatprep.subr.mxu0 0.0
    %229 = vmatpush1.xpose.msra.mxu0 0.0
    %230 = vmatprep.subr.mxu0 0.0
    %231 = vmatpush1.xpose.msra.mxu0 0.0
    %232 = vmatprep.subr.mxu0 0.0
    %233 = vmatpush1.xpose.msra.mxu0 0.0
    %234 = vmatprep.subr.mxu0 0.0
    %235 = vmatpush1.xpose.msra.mxu0 0.0
    %236 = vmatprep.subr.mxu0 0.0
    %237 = vmatpush1.xpose.msra.mxu0 0.0
    %238 = vmatprep.subr.mxu0 0.0
    %239 = vmatpush1.xpose.msra.mxu0 0.0
    %240 = vmatprep.subr.mxu0 0.0
    %241 = vmatpush1.xpose.msra.mxu0 0.0
    %242 = vmatprep.subr.mxu0 0.0
    %243 = vmatpush1.xpose.msra.mxu0 0.0
    %244 = vmatprep.subr.mxu0 0.0
    %245 = vmatpush1.xpose.msra.mxu0 0.0
    %246 = vmatprep.subr.mxu0 0.0
    %247 = vmatpush1.xpose.msra.mxu0 0.0
    %248 = vmatprep.subr.mxu0 0.0
    %249 = vmatpush1.xpose.msra.mxu0 0.0
    %250 = vmatprep.subr.mxu0 0.0
    %251 = vmatpush1.xpose.msra.mxu0 0.0
    %252 = vmatprep.subr.mxu0 0.0
    %253 = vmatpush1.xpose.msra.mxu0 0.0
    %254 = vmatprep.subr.mxu0 0.0
    %255 = vmatpush1.xpose.msra.mxu0 0.0
    %256 = vmatprep.subr.mxu0 0.0
    %257 = vmatpush1.xpose.msra.mxu0 0.0
    %258 = vmatprep.mubr.f32.mxu0 0.0
    %259 = vmatmul.mubr.f32.gmra.mrb[0].mxu0 %v190
    %v260 = vpop.f32.mrb[0].mxu0
    %v261 = vadd.f32 %v185, %v260
    %v262 = vpop.f32.mrb[0].mxu0
    %263 = vdwg.mxu0
    %v264 = vsel %vm189, %v261, -inf
    %265 = vmax.xlane.f32.xlu0 %v264
    %v266 = vpop.xlane.xlu0 %265
    %v267 = vsub.f32 %v261, %v266
    %v268 = vmul.f32 %v267, 1.442695
    %v269 = vpow.pop %v268
    %270 = vrot.lane.b32.xlu0 %v177, 64
    %v271 = vpop.permute.xlu0 %270
    %v274 = vsel %vm189, %v269, 0
    %276 = vmatprep.subr.mxu0 0.0
    %277 = vmatpush1.msra.mxu0 %v271
    %278 = vmatprep.subr.mxu0 0.0
    %279 = vmatpush1.msra.mxu0 0.0
    %280 = vmatprep.subr.mxu0 0.0
    %281 = vmatpush1.msra.mxu0 0.0
    %282 = vmatprep.subr.mxu0 0.0
    %283 = vmatpush1.msra.mxu0 0.0
    %284 = vmatprep.subr.mxu0 0.0
    %285 = vmatpush1.msra.mxu0 0.0
    %286 = vmatprep.subr.mxu0 0.0
    %287 = vmatpush1.msra.mxu0 0.0
    %288 = vmatprep.subr.mxu0 0.0
    %289 = vmatpush1.msra.mxu0 0.0
    %290 = vmatprep.subr.mxu0 0.0
    %291 = vmatpush1.msra.mxu0 0.0
    %292 = vmatprep.subr.mxu0 0.0
    %293 = vmatpush1.msra.mxu0 0.0
    %294 = vmatprep.subr.mxu0 0.0
    %295 = vmatpush1.msra.mxu0 0.0
    %296 = vmatprep.subr.mxu0 0.0
    %297 = vmatpush1.msra.mxu0 0.0
    %298 = vmatprep.subr.mxu0 0.0
    %299 = vmatpush1.msra.mxu0 0.0
    %300 = vmatprep.subr.mxu0 0.0
    %301 = vmatpush1.msra.mxu0 0.0
    %302 = vmatprep.subr.mxu0 0.0
    %303 = vmatpush1.msra.mxu0 0.0
    %304 = vmatprep.subr.mxu0 0.0
    %305 = vmatpush1.msra.mxu0 0.0
    %306 = vmatprep.subr.mxu0 0.0
    %307 = vmatpush1.msra.mxu0 0.0
    %308 = vmatprep.subr.mxu0 0.0
    %309 = vmatpush1.msra.mxu0 0.0
    %310 = vmatprep.subr.mxu0 0.0
    %311 = vmatpush1.msra.mxu0 0.0
    %312 = vmatprep.subr.mxu0 0.0
    %313 = vmatpush1.msra.mxu0 0.0
    %314 = vmatprep.subr.mxu0 0.0
    %315 = vmatpush1.msra.mxu0 0.0
    %316 = vmatprep.subr.mxu0 0.0
    %317 = vmatpush1.msra.mxu0 0.0
    %318 = vmatprep.subr.mxu0 0.0
    %319 = vmatpush1.msra.mxu0 0.0
    %320 = vmatprep.subr.mxu0 0.0
    %321 = vmatpush1.msra.mxu0 0.0
    %322 = vmatprep.subr.mxu0 0.0
    %323 = vmatpush1.msra.mxu0 0.0
    %324 = vmatprep.subr.mxu0 0.0
    %325 = vmatpush1.msra.mxu0 0.0
    %326 = vmatprep.subr.mxu0 0.0
    %327 = vmatpush1.msra.mxu0 0.0
    %328 = vmatprep.subr.mxu0 0.0
    %329 = vmatpush1.msra.mxu0 0.0
    %330 = vmatprep.subr.mxu0 0.0
    %331 = vmatpush1.msra.mxu0 0.0
    %332 = vmatprep.subr.mxu0 0.0
    %333 = vmatpush1.msra.mxu0 0.0
    %334 = vmatprep.subr.mxu0 0.0
    %335 = vmatpush1.msra.mxu0 0.0
    %336 = vmatprep.subr.mxu0 0.0
    %337 = vmatpush1.msra.mxu0 0.0
    %338 = vmatprep.subr.mxu0 0.0
    %339 = vmatpush1.msra.mxu0 0.0
    %340 = vmatprep.mubr.f32.mxu0 0.0
    %341 = vmatmul.mubr.f32.gmra.mrb[0].mxu0 %v274
    %v342 = vpop.f32.mrb[0].mxu0
    %v343 = vadd.f32 0.0, %v342
    %v344 = vpop.f32.mrb[0].mxu0
    %345 = vdwg.mxu0
    %v346 = vsel %vm189, %v269, 0.0
    %347 = vadd.xlane.f32.xlu0 %v346
    %v348 = vpop.xlane.xlu0 %347
    %v349 = vrcp.pop %v348
    %v350 = vmul.f32 %v343, %v349
    %351 = vst.msk [vmem:[#allocation2] sm:$0xff] %vm189, %v350
    %s352 = scalar_lea.vmem %s1, 8
    %v353 = vld [vmem:[%s352] sm:$0xff]
    %354 = vrot.lane.b32.xlu0 %v177, 120
    %v355 = vpop.permute.xlu0 %354
    %356 = vrot.lane.b32.xlu0 %v177, 88
    %v357 = vpop.permute.xlu0 %356
    %v358 = vsel %vm189, %v355, 0
    %v360 = vsel %vm189, %v357, 0
    %362 = vmatprep.subr.mxu0 0.0
    %363 = vmatpush1.xpose.msra.mxu0 %v360
    %364 = vmatprep.subr.mxu0 0.0
    %365 = vmatpush1.xpose.msra.mxu0 0.0
    %366 = vmatprep.subr.mxu0 0.0
    %367 = vmatpush1.xpose.msra.mxu0 0.0
    %368 = vmatprep.subr.mxu0 0.0
    %369 = vmatpush1.xpose.msra.mxu0 0.0
    %370 = vmatprep.subr.mxu0 0.0
    %371 = vmatpush1.xpose.msra.mxu0 0.0
    %372 = vmatprep.subr.mxu0 0.0
    %373 = vmatpush1.xpose.msra.mxu0 0.0
    %374 = vmatprep.subr.mxu0 0.0
    %375 = vmatpush1.xpose.msra.mxu0 0.0
    %376 = vmatprep.subr.mxu0 0.0
    %377 = vmatpush1.xpose.msra.mxu0 0.0
    %378 = vmatprep.subr.mxu0 0.0
    %379 = vmatpush1.xpose.msra.mxu0 0.0
    %380 = vmatprep.subr.mxu0 0.0
    %381 = vmatpush1.xpose.msra.mxu0 0.0
    %382 = vmatprep.subr.mxu0 0.0
    %383 = vmatpush1.xpose.msra.mxu0 0.0
    %384 = vmatprep.subr.mxu0 0.0
    %385 = vmatpush1.xpose.msra.mxu0 0.0
    %386 = vmatprep.subr.mxu0 0.0
    %387 = vmatpush1.xpose.msra.mxu0 0.0
    %388 = vmatprep.subr.mxu0 0.0
    %389 = vmatpush1.xpose.msra.mxu0 0.0
    %390 = vmatprep.subr.mxu0 0.0
    %391 = vmatpush1.xpose.msra.mxu0 0.0
    %392 = vmatprep.subr.mxu0 0.0
    %393 = vmatpush1.xpose.msra.mxu0 0.0
    %394 = vmatprep.subr.mxu0 0.0
    %395 = vmatpush1.xpose.msra.mxu0 0.0
    %396 = vmatprep.subr.mxu0 0.0
    %397 = vmatpush1.xpose.msra.mxu0 0.0
    %398 = vmatprep.subr.mxu0 0.0
    %399 = vmatpush1.xpose.msra.mxu0 0.0
    %400 = vmatprep.subr.mxu0 0.0
    %401 = vmatpush1.xpose.msra.mxu0 0.0
    %402 = vmatprep.subr.mxu0 0.0
    %403 = vmatpush1.xpose.msra.mxu0 0.0
    %404 = vmatprep.subr.mxu0 0.0
    %405 = vmatpush1.xpose.msra.mxu0 0.0
    %406 = vmatprep.subr.mxu0 0.0
    %407 = vmatpush1.xpose.msra.mxu0 0.0
    %408 = vmatprep.subr.mxu0 0.0
    %409 = vmatpush1.xpose.msra.mxu0 0.0
    %410 = vmatprep.subr.mxu0 0.0
    %411 = vmatpush1.xpose.msra.mxu0 0.0
    %412 = vmatprep.subr.mxu0 0.0
    %413 = vmatpush1.xpose.msra.mxu0 0.0
    %414 = vmatprep.subr.mxu0 0.0
    %415 = vmatpush1.xpose.msra.mxu0 0.0
    %416 = vmatprep.subr.mxu0 0.0
    %417 = vmatpush1.xpose.msra.mxu0 0.0
    %418 = vmatprep.subr.mxu0 0.0
    %419 = vmatpush1.xpose.msra.mxu0 0.0
    %420 = vmatprep.subr.mxu0 0.0
    %421 = vmatpush1.xpose.msra.mxu0 0.0
    %422 = vmatprep.subr.mxu0 0.0
    %423 = vmatpush1.xpose.msra.mxu0 0.0
    %424 = vmatprep.subr.mxu0 0.0
    %425 = vmatpush1.xpose.msra.mxu0 0.0
    %426 = vmatprep.mubr.f32.mxu0 0.0
    %427 = vmatmul.mubr.f32.gmra.mrb[0].mxu0 %v358
    %v428 = vpop.f32.mrb[0].mxu0
    %v429 = vadd.f32 %v353, %v428
    %v430 = vpop.f32.mrb[0].mxu0
    %431 = vdwg.mxu0
    %v432 = vsel %vm189, %v429, -inf
    %433 = vmax.xlane.f32.xlu0 %v432
    %v434 = vpop.xlane.xlu0 %433
    %v435 = vsub.f32 %v429, %v434
    %v436 = vmul.f32 %v435, 1.442695
    %v437 = vpow.pop %v436
    %438 = vrot.lane.b32.xlu0 %v177, 56
    %v439 = vpop.permute.xlu0 %438
    %v442 = vsel %vm189, %v437, 0
    %444 = vmatprep.subr.mxu0 0.0
    %445 = vmatpush1.msra.mxu0 %v439
    %446 = vmatprep.subr.mxu0 0.0
    %447 = vmatpush1.msra.mxu0 0.0
    %448 = vmatprep.subr.mxu0 0.0
    %449 = vmatpush1.msra.mxu0 0.0
    %450 = vmatprep.subr.mxu0 0.0
    %451 = vmatpush1.msra.mxu0 0.0
    %452 = vmatprep.subr.mxu0 0.0
    %453 = vmatpush1.msra.mxu0 0.0
    %454 = vmatprep.subr.mxu0 0.0
    %455 = vmatpush1.msra.mxu0 0.0
    %456 = vmatprep.subr.mxu0 0.0
    %457 = vmatpush1.msra.mxu0 0.0
    %458 = vmatprep.subr.mxu0 0.0
    %459 = vmatpush1.msra.mxu0 0.0
    %460 = vmatprep.subr.mxu0 0.0
    %461 = vmatpush1.msra.mxu0 0.0
    %462 = vmatprep.subr.mxu0 0.0
    %463 = vmatpush1.msra.mxu0 0.0
    %464 = vmatprep.subr.mxu0 0.0
    %465 = vmatpush1.msra.mxu0 0.0
    %466 = vmatprep.subr.mxu0 0.0
    %467 = vmatpush1.msra.mxu0 0.0
    %468 = vmatprep.subr.mxu0 0.0
    %469 = vmatpush1.msra.mxu0 0.0
    %470 = vmatprep.subr.mxu0 0.0
    %471 = vmatpush1.msra.mxu0 0.0
    %472 = vmatprep.subr.mxu0 0.0
    %473 = vmatpush1.msra.mxu0 0.0
    %474 = vmatprep.subr.mxu0 0.0
    %475 = vmatpush1.msra.mxu0 0.0
    %476 = vmatprep.subr.mxu0 0.0
    %477 = vmatpush1.msra.mxu0 0.0
    %478 = vmatprep.subr.mxu0 0.0
    %479 = vmatpush1.msra.mxu0 0.0
    %480 = vmatprep.subr.mxu0 0.0
    %481 = vmatpush1.msra.mxu0 0.0
    %482 = vmatprep.subr.mxu0 0.0
    %483 = vmatpush1.msra.mxu0 0.0
    %484 = vmatprep.subr.mxu0 0.0
    %485 = vmatpush1.msra.mxu0 0.0
    %486 = vmatprep.subr.mxu0 0.0
    %487 = vmatpush1.msra.mxu0 0.0
    %488 = vmatprep.subr.mxu0 0.0
    %489 = vmatpush1.msra.mxu0 0.0
    %490 = vmatprep.subr.mxu0 0.0
    %491 = vmatpush1.msra.mxu0 0.0
    %492 = vmatprep.subr.mxu0 0.0
    %493 = vmatpush1.msra.mxu0 0.0
    %494 = vmatprep.subr.mxu0 0.0
    %495 = vmatpush1.msra.mxu0 0.0
    %496 = vmatprep.subr.mxu0 0.0
    %497 = vmatpush1.msra.mxu0 0.0
    %498 = vmatprep.subr.mxu0 0.0
    %499 = vmatpush1.msra.mxu0 0.0
    %500 = vmatprep.subr.mxu0 0.0
    %501 = vmatpush1.msra.mxu0 0.0
    %502 = vmatprep.subr.mxu0 0.0
    %503 = vmatpush1.msra.mxu0 0.0
    %504 = vmatprep.subr.mxu0 0.0
    %505 = vmatpush1.msra.mxu0 0.0
    %506 = vmatprep.subr.mxu0 0.0
    %507 = vmatpush1.msra.mxu0 0.0
    %508 = vmatprep.mubr.f32.mxu0 0.0
    %509 = vmatmul.mubr.f32.gmra.mrb[0].mxu0 %v442
    %v510 = vpop.f32.mrb[0].mxu0
    %v511 = vadd.f32 0.0, %v510
    %v512 = vpop.f32.mrb[0].mxu0
    %513 = vdwg.mxu0
    %v514 = vsel %vm189, %v437, 0.0
    %515 = vadd.xlane.f32.xlu0 %v514
    %v516 = vpop.xlane.xlu0 %515
    %v517 = vrcp.pop %v516
    %v518 = vmul.f32 %v511, %v517
    %520 = vrot.lane.b32.xlu0 %v518, 8
    %v521 = vpop.permute.xlu0 %520
    %vm523 = vcmask 130112
    %524 = vst.msk [vmem:[#allocation2] sm:$0xff] %vm523, %v521
    %s525 = scalar_lea.vmem %s1, 16
    %v526 = vld [vmem:[%s525] sm:$0xff]
    %527 = vrot.lane.b32.xlu0 %v177, 112
    %v528 = vpop.permute.xlu0 %527
    %529 = vrot.lane.b32.xlu0 %v177, 80
    %v530 = vpop.permute.xlu0 %529
    %v531 = vsel %vm189, %v528, 0
    %v533 = vsel %vm189, %v530, 0
    %535 = vmatprep.subr.mxu0 0.0
    %536 = vmatpush1.xpose.msra.mxu0 %v533
    %537 = vmatprep.subr.mxu0 0.0
    %538 = vmatpush1.xpose.msra.mxu0 0.0
    %539 = vmatprep.subr.mxu0 0.0
    %540 = vmatpush1.xpose.msra.mxu0 0.0
    %541 = vmatprep.subr.mxu0 0.0
    %542 = vmatpush1.xpose.msra.mxu0 0.0
    %543 = vmatprep.subr.mxu0 0.0
    %544 = vmatpush1.xpose.msra.mxu0 0.0
    %545 = vmatprep.subr.mxu0 0.0
    %546 = vmatpush1.xpose.msra.mxu0 0.0
    %547 = vmatprep.subr.mxu0 0.0
    %548 = vmatpush1.xpose.msra.mxu0 0.0
    %549 = vmatprep.subr.mxu0 0.0
    %550 = vmatpush1.xpose.msra.mxu0 0.0
    %551 = vmatprep.subr.mxu0 0.0
    %552 = vmatpush1.xpose.msra.mxu0 0.0
    %553 = vmatprep.subr.mxu0 0.0
    %554 = vmatpush1.xpose.msra.mxu0 0.0
    %555 = vmatprep.subr.mxu0 0.0
    %556 = vmatpush1.xpose.msra.mxu0 0.0
    %557 = vmatprep.subr.mxu0 0.0
    %558 = vmatpush1.xpose.msra.mxu0 0.0
    %559 = vmatprep.subr.mxu0 0.0
    %560 = vmatpush1.xpose.msra.mxu0 0.0
    %561 = vmatprep.subr.mxu0 0.0
    %562 = vmatpush1.xpose.msra.mxu0 0.0
    %563 = vmatprep.subr.mxu0 0.0
    %564 = vmatpush1.xpose.msra.mxu0 0.0
    %565 = vmatprep.subr.mxu0 0.0
    %566 = vmatpush1.xpose.msra.mxu0 0.0
    %567 = vmatprep.subr.mxu0 0.0
    %568 = vmatpush1.xpose.msra.mxu0 0.0
    %569 = vmatprep.subr.mxu0 0.0
    %570 = vmatpush1.xpose.msra.mxu0 0.0
    %571 = vmatprep.subr.mxu0 0.0
    %572 = vmatpush1.xpose.msra.mxu0 0.0
    %573 = vmatprep.subr.mxu0 0.0
    %574 = vmatpush1.xpose.msra.mxu0 0.0
    %575 = vmatprep.subr.mxu0 0.0
    %576 = vmatpush1.xpose.msra.mxu0 0.0
    %577 = vmatprep.subr.mxu0 0.0
    %578 = vmatpush1.xpose.msra.mxu0 0.0
    %579 = vmatprep.subr.mxu0 0.0
    %580 = vmatpush1.xpose.msra.mxu0 0.0
    %581 = vmatprep.subr.mxu0 0.0
    %582 = vmatpush1.xpose.msra.mxu0 0.0
    %583 = vmatprep.subr.mxu0 0.0
    %584 = vmatpush1.xpose.msra.mxu0 0.0
    %585 = vmatprep.subr.mxu0 0.0
    %586 = vmatpush1.xpose.msra.mxu0 0.0
    %587 = vmatprep.subr.mxu0 0.0
    %588 = vmatpush1.xpose.msra.mxu0 0.0
    %589 = vmatprep.subr.mxu0 0.0
    %590 = vmatpush1.xpose.msra.mxu0 0.0
    %591 = vmatprep.subr.mxu0 0.0
    %592 = vmatpush1.xpose.msra.mxu0 0.0
    %593 = vmatprep.subr.mxu0 0.0
    %594 = vmatpush1.xpose.msra.mxu0 0.0
    %595 = vmatprep.subr.mxu0 0.0
    %596 = vmatpush1.xpose.msra.mxu0 0.0
    %597 = vmatprep.subr.mxu0 0.0
    %598 = vmatpush1.xpose.msra.mxu0 0.0
    %599 = vmatprep.mubr.f32.mxu0 0.0
    %600 = vmatmul.mubr.f32.gmra.mrb[0].mxu0 %v531
    %v601 = vpop.f32.mrb[0].mxu0
    %v602 = vadd.f32 %v526, %v601
    %v603 = vpop.f32.mrb[0].mxu0
    %604 = vdwg.mxu0
    %v605 = vsel %vm189, %v602, -inf
    %606 = vmax.xlane.f32.xlu0 %v605
    %v607 = vpop.xlane.xlu0 %606
    %v608 = vsub.f32 %v602, %v607
    %v609 = vmul.f32 %v608, 1.442695
    %v610 = vpow.pop %v609
    %611 = vrot.lane.b32.xlu0 %v177, 48
    %v612 = vpop.permute.xlu0 %611
    %v615 = vsel %vm189, %v610, 0
    %617 = vmatprep.subr.mxu0 0.0
    %618 = vmatpush1.msra.mxu0 %v612
    %619 = vmatprep.subr.mxu0 0.0
    %620 = vmatpush1.msra.mxu0 0.0
    %621 = vmatprep.subr.mxu0 0.0
    %622 = vmatpush1.msra.mxu0 0.0
    %623 = vmatprep.subr.mxu0 0.0
    %624 = vmatpush1.msra.mxu0 0.0
    %625 = vmatprep.subr.mxu0 0.0
    %626 = vmatpush1.msra.mxu0 0.0
    %627 = vmatprep.subr.mxu0 0.0
    %628 = vmatpush1.msra.mxu0 0.0
    %629 = vmatprep.subr.mxu0 0.0
    %630 = vmatpush1.msra.mxu0 0.0
    %631 = vmatprep.subr.mxu0 0.0
    %632 = vmatpush1.msra.mxu0 0.0
    %633 = vmatprep.subr.mxu0 0.0
    %634 = vmatpush1.msra.mxu0 0.0
    %635 = vmatprep.subr.mxu0 0.0
    %636 = vmatpush1.msra.mxu0 0.0
    %637 = vmatprep.subr.mxu0 0.0
    %638 = vmatpush1.msra.mxu0 0.0
    %639 = vmatprep.subr.mxu0 0.0
    %640 = vmatpush1.msra.mxu0 0.0
    %641 = vmatprep.subr.mxu0 0.0
    %642 = vmatpush1.msra.mxu0 0.0
    %643 = vmatprep.subr.mxu0 0.0
    %644 = vmatpush1.msra.mxu0 0.0
    %645 = vmatprep.subr.mxu0 0.0
    %646 = vmatpush1.msra.mxu0 0.0
    %647 = vmatprep.subr.mxu0 0.0
    %648 = vmatpush1.msra.mxu0 0.0
    %649 = vmatprep.subr.mxu0 0.0
    %650 = vmatpush1.msra.mxu0 0.0
    %651 = vmatprep.subr.mxu0 0.0
    %652 = vmatpush1.msra.mxu0 0.0
    %653 = vmatprep.subr.mxu0 0.0
    %654 = vmatpush1.msra.mxu0 0.0
    %655 = vmatprep.subr.mxu0 0.0
    %656 = vmatpush1.msra.mxu0 0.0
    %657 = vmatprep.subr.mxu0 0.0
    %658 = vmatpush1.msra.mxu0 0.0
    %659 = vmatprep.subr.mxu0 0.0
    %660 = vmatpush1.msra.mxu0 0.0
    %661 = vmatprep.subr.mxu0 0.0
    %662 = vmatpush1.msra.mxu0 0.0
    %663 = vmatprep.subr.mxu0 0.0
    %664 = vmatpush1.msra.mxu0 0.0
    %665 = vmatprep.subr.mxu0 0.0
    %666 = vmatpush1.msra.mxu0 0.0
    %667 = vmatprep.subr.mxu0 0.0
    %668 = vmatpush1.msra.mxu0 0.0
    %669 = vmatprep.subr.mxu0 0.0
    %670 = vmatpush1.msra.mxu0 0.0
    %671 = vmatprep.subr.mxu0 0.0
    %672 = vmatpush1.msra.mxu0 0.0
    %673 = vmatprep.subr.mxu0 0.0
    %674 = vmatpush1.msra.mxu0 0.0
    %675 = vmatprep.subr.mxu0 0.0
    %676 = vmatpush1.msra.mxu0 0.0
    %677 = vmatprep.subr.mxu0 0.0
    %678 = vmatpush1.msra.mxu0 0.0
    %679 = vmatprep.subr.mxu0 0.0
    %680 = vmatpush1.msra.mxu0 0.0
    %681 = vmatprep.mubr.f32.mxu0 0.0
    %682 = vmatmul.mubr.f32.gmra.mrb[0].mxu0 %v615
    %v683 = vpop.f32.mrb[0].mxu0
    %v684 = vadd.f32 0.0, %v683
    %v685 = vpop.f32.mrb[0].mxu0
    %686 = vdwg.mxu0
    %v687 = vsel %vm189, %v610, 0.0
    %688 = vadd.xlane.f32.xlu0 %v687
    %v689 = vpop.xlane.xlu0 %688
    %v690 = vrcp.pop %v689
    %v691 = vmul.f32 %v684, %v690
    %693 = vrot.lane.b32.xlu0 %v691, 16
    %v694 = vpop.permute.xlu0 %693
    %vm696 = vcmask 195712
    %697 = vst.msk [vmem:[#allocation2] sm:$0xff] %vm696, %v694
    %s698 = scalar_lea.vmem %s1, 24
    %v699 = vld [vmem:[%s698] sm:$0xff]
    %700 = vrot.lane.b32.xlu0 %v177, 104
    %v701 = vpop.permute.xlu0 %700
    %702 = vrot.lane.b32.xlu0 %v177, 72
    %v703 = vpop.permute.xlu0 %702
    %v704 = vsel %vm189, %v701, 0
    %v706 = vsel %vm189, %v703, 0
    %708 = vmatprep.subr.mxu0 0.0
    %709 = vmatpush1.xpose.msra.mxu0 %v706
    %710 = vmatprep.subr.mxu0 0.0
    %711 = vmatpush1.xpose.msra.mxu0 0.0
    %712 = vmatprep.subr.mxu0 0.0
    %713 = vmatpush1.xpose.msra.mxu0 0.0
    %714 = vmatprep.subr.mxu0 0.0
    %715 = vmatpush1.xpose.msra.mxu0 0.0
    %716 = vmatprep.subr.mxu0 0.0
    %717 = vmatpush1.xpose.msra.mxu0 0.0
    %718 = vmatprep.subr.mxu0 0.0
    %719 = vmatpush1.xpose.msra.mxu0 0.0
    %720 = vmatprep.subr.mxu0 0.0
    %721 = vmatpush1.xpose.msra.mxu0 0.0
    %722 = vmatprep.subr.mxu0 0.0
    %723 = vmatpush1.xpose.msra.mxu0 0.0
    %724 = vmatprep.subr.mxu0 0.0
    %725 = vmatpush1.xpose.msra.mxu0 0.0
    %726 = vmatprep.subr.mxu0 0.0
    %727 = vmatpush1.xpose.msra.mxu0 0.0
    %728 = vmatprep.subr.mxu0 0.0
    %729 = vmatpush1.xpose.msra.mxu0 0.0
    %730 = vmatprep.subr.mxu0 0.0
    %731 = vmatpush1.xpose.msra.mxu0 0.0
    %732 = vmatprep.subr.mxu0 0.0
    %733 = vmatpush1.xpose.msra.mxu0 0.0
    %734 = vmatprep.subr.mxu0 0.0
    %735 = vmatpush1.xpose.msra.mxu0 0.0
    %736 = vmatprep.subr.mxu0 0.0
    %737 = vmatpush1.xpose.msra.mxu0 0.0
    %738 = vmatprep.subr.mxu0 0.0
    %739 = vmatpush1.xpose.msra.mxu0 0.0
    %740 = vmatprep.subr.mxu0 0.0
    %741 = vmatpush1.xpose.msra.mxu0 0.0
    %742 = vmatprep.subr.mxu0 0.0
    %743 = vmatpush1.xpose.msra.mxu0 0.0
    %744 = vmatprep.subr.mxu0 0.0
    %745 = vmatpush1.xpose.msra.mxu0 0.0
    %746 = vmatprep.subr.mxu0 0.0
    %747 = vmatpush1.xpose.msra.mxu0 0.0
    %748 = vmatprep.subr.mxu0 0.0
    %749 = vmatpush1.xpose.msra.mxu0 0.0
    %750 = vmatprep.subr.mxu0 0.0
    %751 = vmatpush1.xpose.msra.mxu0 0.0
    %752 = vmatprep.subr.mxu0 0.0
    %753 = vmatpush1.xpose.msra.mxu0 0.0
    %754 = vmatprep.subr.mxu0 0.0
    %755 = vmatpush1.xpose.msra.mxu0 0.0
    %756 = vmatprep.subr.mxu0 0.0
    %757 = vmatpush1.xpose.msra.mxu0 0.0
    %758 = vmatprep.subr.mxu0 0.0
    %759 = vmatpush1.xpose.msra.mxu0 0.0
    %760 = vmatprep.subr.mxu0 0.0
    %761 = vmatpush1.xpose.msra.mxu0 0.0
    %762 = vmatprep.subr.mxu0 0.0
    %763 = vmatpush1.xpose.msra.mxu0 0.0
    %764 = vmatprep.subr.mxu0 0.0
    %765 = vmatpush1.xpose.msra.mxu0 0.0
    %766 = vmatprep.subr.mxu0 0.0
    %767 = vmatpush1.xpose.msra.mxu0 0.0
    %768 = vmatprep.subr.mxu0 0.0
    %769 = vmatpush1.xpose.msra.mxu0 0.0
    %770 = vmatprep.subr.mxu0 0.0
    %771 = vmatpush1.xpose.msra.mxu0 0.0
    %772 = vmatprep.mubr.f32.mxu0 0.0
    %773 = vmatmul.mubr.f32.gmra.mrb[0].mxu0 %v704
    %v774 = vpop.f32.mrb[0].mxu0
    %v775 = vadd.f32 %v699, %v774
    %v776 = vpop.f32.mrb[0].mxu0
    %777 = vdwg.mxu0
    %v778 = vsel %vm189, %v775, -inf
    %779 = vmax.xlane.f32.xlu0 %v778
    %v780 = vpop.xlane.xlu0 %779
    %v781 = vsub.f32 %v775, %v780
    %v782 = vmul.f32 %v781, 1.442695
    %v783 = vpow.pop %v782
    %784 = vrot.lane.b32.xlu0 %v177, 40
    %v785 = vpop.permute.xlu0 %784
    %v788 = vsel %vm189, %v783, 0
    %790 = vmatprep.subr.mxu0 0.0
    %791 = vmatpush1.msra.mxu0 %v785
    %792 = vmatprep.subr.mxu0 0.0
    %793 = vmatpush1.msra.mxu0 0.0
    %794 = vmatprep.subr.mxu0 0.0
    %795 = vmatpush1.msra.mxu0 0.0
    %796 = vmatprep.subr.mxu0 0.0
    %797 = vmatpush1.msra.mxu0 0.0
    %798 = vmatprep.subr.mxu0 0.0
    %799 = vmatpush1.msra.mxu0 0.0
    %800 = vmatprep.subr.mxu0 0.0
    %801 = vmatpush1.msra.mxu0 0.0
    %802 = vmatprep.subr.mxu0 0.0
    %803 = vmatpush1.msra.mxu0 0.0
    %804 = vmatprep.subr.mxu0 0.0
    %805 = vmatpush1.msra.mxu0 0.0
    %806 = vmatprep.subr.mxu0 0.0
    %807 = vmatpush1.msra.mxu0 0.0
    %808 = vmatprep.subr.mxu0 0.0
    %809 = vmatpush1.msra.mxu0 0.0
    %810 = vmatprep.subr.mxu0 0.0
    %811 = vmatpush1.msra.mxu0 0.0
    %812 = vmatprep.subr.mxu0 0.0
    %813 = vmatpush1.msra.mxu0 0.0
    %814 = vmatprep.subr.mxu0 0.0
    %815 = vmatpush1.msra.mxu0 0.0
    %816 = vmatprep.subr.mxu0 0.0
    %817 = vmatpush1.msra.mxu0 0.0
    %818 = vmatprep.subr.mxu0 0.0
    %819 = vmatpush1.msra.mxu0 0.0
    %820 = vmatprep.subr.mxu0 0.0
    %821 = vmatpush1.msra.mxu0 0.0
    %822 = vmatprep.subr.mxu0 0.0
    %823 = vmatpush1.msra.mxu0 0.0
    %824 = vmatprep.subr.mxu0 0.0
    %825 = vmatpush1.msra.mxu0 0.0
    %826 = vmatprep.subr.mxu0 0.0
    %827 = vmatpush1.msra.mxu0 0.0
    %828 = vmatprep.subr.mxu0 0.0
    %829 = vmatpush1.msra.mxu0 0.0
    %830 = vmatprep.subr.mxu0 0.0
    %831 = vmatpush1.msra.mxu0 0.0
    %832 = vmatprep.subr.mxu0 0.0
    %833 = vmatpush1.msra.mxu0 0.0
    %834 = vmatprep.subr.mxu0 0.0
    %835 = vmatpush1.msra.mxu0 0.0
    %836 = vmatprep.subr.mxu0 0.0
    %837 = vmatpush1.msra.mxu0 0.0
    %838 = vmatprep.subr.mxu0 0.0
    %839 = vmatpush1.msra.mxu0 0.0
    %840 = vmatprep.subr.mxu0 0.0
    %841 = vmatpush1.msra.mxu0 0.0
    %842 = vmatprep.subr.mxu0 0.0
    %843 = vmatpush1.msra.mxu0 0.0
    %844 = vmatprep.subr.mxu0 0.0
    %845 = vmatpush1.msra.mxu0 0.0
    %846 = vmatprep.subr.mxu0 0.0
    %847 = vmatpush1.msra.mxu0 0.0
    %848 = vmatprep.subr.mxu0 0.0
    %849 = vmatpush1.msra.mxu0 0.0
    %850 = vmatprep.subr.mxu0 0.0
    %851 = vmatpush1.msra.mxu0 0.0
    %852 = vmatprep.subr.mxu0 0.0
    %853 = vmatpush1.msra.mxu0 0.0
    %854 = vmatprep.mubr.f32.mxu0 0.0
    %855 = vmatmul.mubr.f32.gmra.mrb[0].mxu0 %v788
    %v856 = vpop.f32.mrb[0].mxu0
    %v857 = vadd.f32 0.0, %v856
    %v858 = vpop.f32.mrb[0].mxu0
    %859 = vdwg.mxu0
    %v860 = vsel %vm189, %v783, 0.0
    %861 = vadd.xlane.f32.xlu0 %v860
    %v862 = vpop.xlane.xlu0 %861
    %v863 = vrcp.pop %v862
    %v864 = vmul.f32 %v857, %v863
    %866 = vrot.lane.b32.xlu0 %v864, 24
    %v867 = vpop.permute.xlu0 %866
    %vm869 = vcmask 261312
    %870 = vst.msk [vmem:[#allocation2] sm:$0xff] %vm869, %v867
    %s871 = scalar_lea.vmem %s1, 32
    %v872 = vld [vmem:[%s871] sm:$0xff]
    %874 = vrot.lane.b32.xlu0 %v182, 96
    %v875 = vpop.permute.xlu0 %874
    %v876 = vsel %vm189, %v182, 0
    %v878 = vsel %vm189, %v875, 0
    %880 = vmatprep.subr.mxu0 0.0
    %881 = vmatpush1.xpose.msra.mxu0 %v878
    %882 = vmatprep.subr.mxu0 0.0
    %883 = vmatpush1.xpose.msra.mxu0 0.0
    %884 = vmatprep.subr.mxu0 0.0
    %885 = vmatpush1.xpose.msra.mxu0 0.0
    %886 = vmatprep.subr.mxu0 0.0
    %887 = vmatpush1.xpose.msra.mxu0 0.0
    %888 = vmatprep.subr.mxu0 0.0
    %889 = vmatpush1.xpose.msra.mxu0 0.0
    %890 = vmatprep.subr.mxu0 0.0
    %891 = vmatpush1.xpose.msra.mxu0 0.0
    %892 = vmatprep.subr.mxu0 0.0
    %893 = vmatpush1.xpose.msra.mxu0 0.0
    %894 = vmatprep.subr.mxu0 0.0
    %895 = vmatpush1.xpose.msra.mxu0 0.0
    %896 = vmatprep.subr.mxu0 0.0
    %897 = vmatpush1.xpose.msra.mxu0 0.0
    %898 = vmatprep.subr.mxu0 0.0
    %899 = vmatpush1.xpose.msra.mxu0 0.0
    %900 = vmatprep.subr.mxu0 0.0
    %901 = vmatpush1.xpose.msra.mxu0 0.0
    %902 = vmatprep.subr.mxu0 0.0
    %903 = vmatpush1.xpose.msra.mxu0 0.0
    %904 = vmatprep.subr.mxu0 0.0
    %905 = vmatpush1.xpose.msra.mxu0 0.0
    %906 = vmatprep.subr.mxu0 0.0
    %907 = vmatpush1.xpose.msra.mxu0 0.0
    %908 = vmatprep.subr.mxu0 0.0
    %909 = vmatpush1.xpose.msra.mxu0 0.0
    %910 = vmatprep.subr.mxu0 0.0
    %911 = vmatpush1.xpose.msra.mxu0 0.0
    %912 = vmatprep.subr.mxu0 0.0
    %913 = vmatpush1.xpose.msra.mxu0 0.0
    %914 = vmatprep.subr.mxu0 0.0
    %915 = vmatpush1.xpose.msra.mxu0 0.0
    %916 = vmatprep.subr.mxu0 0.0
    %917 = vmatpush1.xpose.msra.mxu0 0.0
    %918 = vmatprep.subr.mxu0 0.0
    %919 = vmatpush1.xpose.msra.mxu0 0.0
    %920 = vmatprep.subr.mxu0 0.0
    %921 = vmatpush1.xpose.msra.mxu0 0.0
    %922 = vmatprep.subr.mxu0 0.0
    %923 = vmatpush1.xpose.msra.mxu0 0.0
    %924 = vmatprep.subr.mxu0 0.0
    %925 = vmatpush1.xpose.msra.mxu0 0.0
    %926 = vmatprep.subr.mxu0 0.0
    %927 = vmatpush1.xpose.msra.mxu0 0.0
    %928 = vmatprep.subr.mxu0 0.0
    %929 = vmatpush1.xpose.msra.mxu0 0.0
    %930 = vmatprep.subr.mxu0 0.0
    %931 = vmatpush1.xpose.msra.mxu0 0.0
    %932 = vmatprep.subr.mxu0 0.0
    %933 = vmatpush1.xpose.msra.mxu0 0.0
    %934 = vmatprep.subr.mxu0 0.0
    %935 = vmatpush1.xpose.msra.mxu0 0.0
    %936 = vmatprep.subr.mxu0 0.0
    %937 = vmatpush1.xpose.msra.mxu0 0.0
    %938 = vmatprep.subr.mxu0 0.0
    %939 = vmatpush1.xpose.msra.mxu0 0.0
    %940 = vmatprep.subr.mxu0 0.0
    %941 = vmatpush1.xpose.msra.mxu0 0.0
    %942 = vmatprep.subr.mxu0 0.0
    %943 = vmatpush1.xpose.msra.mxu0 0.0
    %944 = vmatprep.mubr.f32.mxu0 0.0
    %945 = vmatmul.mubr.f32.gmra.mrb[0].mxu0 %v876
    %v946 = vpop.f32.mrb[0].mxu0
    %v947 = vadd.f32 %v872, %v946
    %v948 = vpop.f32.mrb[0].mxu0
    %949 = vdwg.mxu0
    %v950 = vsel %vm189, %v947, -inf
    %951 = vmax.xlane.f32.xlu0 %v950
    %v952 = vpop.xlane.xlu0 %951
    %v953 = vsub.f32 %v947, %v952
    %v954 = vmul.f32 %v953, 1.442695
    %v955 = vpow.pop %v954
    %956 = vrot.lane.b32.xlu0 %v182, 64
    %v957 = vpop.permute.xlu0 %956
    %v960 = vsel %vm189, %v955, 0
    %962 = vmatprep.subr.mxu0 0.0
    %963 = vmatpush1.msra.mxu0 %v957
    %964 = vmatprep.subr.mxu0 0.0
    %965 = vmatpush1.msra.mxu0 0.0
    %966 = vmatprep.subr.mxu0 0.0
    %967 = vmatpush1.msra.mxu0 0.0
    %968 = vmatprep.subr.mxu0 0.0
    %969 = vmatpush1.msra.mxu0 0.0
    %970 = vmatprep.subr.mxu0 0.0
    %971 = vmatpush1.msra.mxu0 0.0
    %972 = vmatprep.subr.mxu0 0.0
    %973 = vmatpush1.msra.mxu0 0.0
    %974 = vmatprep.subr.mxu0 0.0
    %975 = vmatpush1.msra.mxu0 0.0
    %976 = vmatprep.subr.mxu0 0.0
    %977 = vmatpush1.msra.mxu0 0.0
    %978 = vmatprep.subr.mxu0 0.0
    %979 = vmatpush1.msra.mxu0 0.0
    %980 = vmatprep.subr.mxu0 0.0
    %981 = vmatpush1.msra.mxu0 0.0
    %982 = vmatprep.subr.mxu0 0.0
    %983 = vmatpush1.msra.mxu0 0.0
    %984 = vmatprep.subr.mxu0 0.0
    %985 = vmatpush1.msra.mxu0 0.0
    %986 = vmatprep.subr.mxu0 0.0
    %987 = vmatpush1.msra.mxu0 0.0
    %988 = vmatprep.subr.mxu0 0.0
    %989 = vmatpush1.msra.mxu0 0.0
    %990 = vmatprep.subr.mxu0 0.0
    %991 = vmatpush1.msra.mxu0 0.0
    %992 = vmatprep.subr.mxu0 0.0
    %993 = vmatpush1.msra.mxu0 0.0
    %994 = vmatprep.subr.mxu0 0.0
    %995 = vmatpush1.msra.mxu0 0.0
    %996 = vmatprep.subr.mxu0 0.0
    %997 = vmatpush1.msra.mxu0 0.0
    %998 = vmatprep.subr.mxu0 0.0
    %999 = vmatpush1.msra.mxu0 0.0
    %1000 = vmatprep.subr.mxu0 0.0
    %1001 = vmatpush1.msra.mxu0 0.0
    %1002 = vmatprep.subr.mxu0 0.0
    %1003 = vmatpush1.msra.mxu0 0.0
    %1004 = vmatprep.subr.mxu0 0.0
    %1005 = vmatpush1.msra.mxu0 0.0
    %1006 = vmatprep.subr.mxu0 0.0
    %1007 = vmatpush1.msra.mxu0 0.0
    %1008 = vmatprep.subr.mxu0 0.0
    %1009 = vmatpush1.msra.mxu0 0.0
    %1010 = vmatprep.subr.mxu0 0.0
    %1011 = vmatpush1.msra.mxu0 0.0
    %1012 = vmatprep.subr.mxu0 0.0
    %1013 = vmatpush1.msra.mxu0 0.0
    %1014 = vmatprep.subr.mxu0 0.0
    %1015 = vmatpush1.msra.mxu0 0.0
    %1016 = vmatprep.subr.mxu0 0.0
    %1017 = vmatpush1.msra.mxu0 0.0
    %1018 = vmatprep.subr.mxu0 0.0
    %1019 = vmatpush1.msra.mxu0 0.0
    %1020 = vmatprep.subr.mxu0 0.0
    %1021 = vmatpush1.msra.mxu0 0.0
    %1022 = vmatprep.subr.mxu0 0.0
    %1023 = vmatpush1.msra.mxu0 0.0
    %1024 = vmatprep.subr.mxu0 0.0
    %1025 = vmatpush1.msra.mxu0 0.0
    %1026 = vmatprep.mubr.f32.mxu0 0.0
    %1027 = vmatmul.mubr.f32.gmra.mrb[0].mxu0 %v960
    %v1028 = vpop.f32.mrb[0].mxu0
    %v1029 = vadd.f32 0.0, %v1028
    %v1030 = vpop.f32.mrb[0].mxu0
    %1031 = vdwg.mxu0
    %v1032 = vsel %vm189, %v955, 0.0
    %1033 = vadd.xlane.f32.xlu0 %v1032
    %v1034 = vpop.xlane.xlu0 %1033
    %v1035 = vrcp.pop %v1034
    %v1036 = vmul.f32 %v1029, %v1035
    %1037 = vst.msk [vmem:[#allocation2 + $0x8] sm:$0xff] %vm189, %v1036
    %s1038 = scalar_lea.vmem %s1, 40
    %v1039 = vld [vmem:[%s1038] sm:$0xff]
    %1040 = vrot.lane.b32.xlu0 %v182, 120
    %v1041 = vpop.permute.xlu0 %1040
    %1042 = vrot.lane.b32.xlu0 %v182, 88
    %v1043 = vpop.permute.xlu0 %1042
    %v1044 = vsel %vm189, %v1041, 0
    %v1046 = vsel %vm189, %v1043, 0
    %1048 = vmatprep.subr.mxu0 0.0
    %1049 = vmatpush1.xpose.msra.mxu0 %v1046
    %1050 = vmatprep.subr.mxu0 0.0
    %1051 = vmatpush1.xpose.msra.mxu0 0.0
    %1052 = vmatprep.subr.mxu0 0.0
    %1053 = vmatpush1.xpose.msra.mxu0 0.0
    %1054 = vmatprep.subr.mxu0 0.0
    %1055 = vmatpush1.xpose.msra.mxu0 0.0
    %1056 = vmatprep.subr.mxu0 0.0
    %1057 = vmatpush1.xpose.msra.mxu0 0.0
    %1058 = vmatprep.subr.mxu0 0.0
    %1059 = vmatpush1.xpose.msra.mxu0 0.0
    %1060 = vmatprep.subr.mxu0 0.0
    %1061 = vmatpush1.xpose.msra.mxu0 0.0
    %1062 = vmatprep.subr.mxu0 0.0
    %1063 = vmatpush1.xpose.msra.mxu0 0.0
    %1064 = vmatprep.subr.mxu0 0.0
    %1065 = vmatpush1.xpose.msra.mxu0 0.0
    %1066 = vmatprep.subr.mxu0 0.0
    %1067 = vmatpush1.xpose.msra.mxu0 0.0
    %1068 = vmatprep.subr.mxu0 0.0
    %1069 = vmatpush1.xpose.msra.mxu0 0.0
    %1070 = vmatprep.subr.mxu0 0.0
    %1071 = vmatpush1.xpose.msra.mxu0 0.0
    %1072 = vmatprep.subr.mxu0 0.0
    %1073 = vmatpush1.xpose.msra.mxu0 0.0
    %1074 = vmatprep.subr.mxu0 0.0
    %1075 = vmatpush1.xpose.msra.mxu0 0.0
    %1076 = vmatprep.subr.mxu0 0.0
    %1077 = vmatpush1.xpose.msra.mxu0 0.0
    %1078 = vmatprep.subr.mxu0 0.0
    %1079 = vmatpush1.xpose.msra.mxu0 0.0
    %1080 = vmatprep.subr.mxu0 0.0
    %1081 = vmatpush1.xpose.msra.mxu0 0.0
    %1082 = vmatprep.subr.mxu0 0.0
    %1083 = vmatpush1.xpose.msra.mxu0 0.0
    %1084 = vmatprep.subr.mxu0 0.0
    %1085 = vmatpush1.xpose.msra.mxu0 0.0
    %1086 = vmatprep.subr.mxu0 0.0
    %1087 = vmatpush1.xpose.msra.mxu0 0.0
    %1088 = vmatprep.subr.mxu0 0.0
    %1089 = vmatpush1.xpose.msra.mxu0 0.0
    %1090 = vmatprep.subr.mxu0 0.0
    %1091 = vmatpush1.xpose.msra.mxu0 0.0
    %1092 = vmatprep.subr.mxu0 0.0
    %1093 = vmatpush1.xpose.msra.mxu0 0.0
    %1094 = vmatprep.subr.mxu0 0.0
    %1095 = vmatpush1.xpose.msra.mxu0 0.0
    %1096 = vmatprep.subr.mxu0 0.0
    %1097 = vmatpush1.xpose.msra.mxu0 0.0
    %1098 = vmatprep.subr.mxu0 0.0
    %1099 = vmatpush1.xpose.msra.mxu0 0.0
    %1100 = vmatprep.subr.mxu0 0.0
    %1101 = vmatpush1.xpose.msra.mxu0 0.0
    %1102 = vmatprep.subr.mxu0 0.0
    %1103 = vmatpush1.xpose.msra.mxu0 0.0
    %1104 = vmatprep.subr.mxu0 0.0
    %1105 = vmatpush1.xpose.msra.mxu0 0.0
    %1106 = vmatprep.subr.mxu0 0.0
    %1107 = vmatpush1.xpose.msra.mxu0 0.0
    %1108 = vmatprep.subr.mxu0 0.0
    %1109 = vmatpush1.xpose.msra.mxu0 0.0
    %1110 = vmatprep.subr.mxu0 0.0
    %1111 = vmatpush1.xpose.msra.mxu0 0.0
    %1112 = vmatprep.mubr.f32.mxu0 0.0
    %1113 = vmatmul.mubr.f32.gmra.mrb[0].mxu0 %v1044
    %v1114 = vpop.f32.mrb[0].mxu0
    %v1115 = vadd.f32 %v1039, %v1114
    %v1116 = vpop.f32.mrb[0].mxu0
    %1117 = vdwg.mxu0
    %v1118 = vsel %vm189, %v1115, -inf
    %1119 = vmax.xlane.f32.xlu0 %v1118
    %v1120 = vpop.xlane.xlu0 %1119
    %v1121 = vsub.f32 %v1115, %v1120
    %v1122 = vmul.f32 %v1121, 1.442695
    %v1123 = vpow.pop %v1122
    %1124 = vrot.lane.b32.xlu0 %v182, 56
    %v1125 = vpop.permute.xlu0 %1124
    %v1128 = vsel %vm189, %v1123, 0
    %1130 = vmatprep.subr.mxu0 0.0
    %1131 = vmatpush1.msra.mxu0 %v1125
    %1132 = vmatprep.subr.mxu0 0.0
    %1133 = vmatpush1.msra.mxu0 0.0
    %1134 = vmatprep.subr.mxu0 0.0
    %1135 = vmatpush1.msra.mxu0 0.0
    %1136 = vmatprep.subr.mxu0 0.0
    %1137 = vmatpush1.msra.mxu0 0.0
    %1138 = vmatprep.subr.mxu0 0.0
    %1139 = vmatpush1.msra.mxu0 0.0
    %1140 = vmatprep.subr.mxu0 0.0
    %1141 = vmatpush1.msra.mxu0 0.0
    %1142 = vmatprep.subr.mxu0 0.0
    %1143 = vmatpush1.msra.mxu0 0.0
    %1144 = vmatprep.subr.mxu0 0.0
    %1145 = vmatpush1.msra.mxu0 0.0
    %1146 = vmatprep.subr.mxu0 0.0
    %1147 = vmatpush1.msra.mxu0 0.0
    %1148 = vmatprep.subr.mxu0 0.0
    %1149 = vmatpush1.msra.mxu0 0.0
    %1150 = vmatprep.subr.mxu0 0.0
    %1151 = vmatpush1.msra.mxu0 0.0
    %1152 = vmatprep.subr.mxu0 0.0
    %1153 = vmatpush1.msra.mxu0 0.0
    %1154 = vmatprep.subr.mxu0 0.0
    %1155 = vmatpush1.msra.mxu0 0.0
    %1156 = vmatprep.subr.mxu0 0.0
    %1157 = vmatpush1.msra.mxu0 0.0
    %1158 = vmatprep.subr.mxu0 0.0
    %1159 = vmatpush1.msra.mxu0 0.0
    %1160 = vmatprep.subr.mxu0 0.0
    %1161 = vmatpush1.msra.mxu0 0.0
    %1162 = vmatprep.subr.mxu0 0.0
    %1163 = vmatpush1.msra.mxu0 0.0
    %1164 = vmatprep.subr.mxu0 0.0
    %1165 = vmatpush1.msra.mxu0 0.0
    %1166 = vmatprep.subr.mxu0 0.0
    %1167 = vmatpush1.msra.mxu0 0.0
    %1168 = vmatprep.subr.mxu0 0.0
    %1169 = vmatpush1.msra.mxu0 0.0
    %1170 = vmatprep.subr.mxu0 0.0
    %1171 = vmatpush1.msra.mxu0 0.0
    %1172 = vmatprep.subr.mxu0 0.0
    %1173 = vmatpush1.msra.mxu0 0.0
    %1174 = vmatprep.subr.mxu0 0.0
    %1175 = vmatpush1.msra.mxu0 0.0
    %1176 = vmatprep.subr.mxu0 0.0
    %1177 = vmatpush1.msra.mxu0 0.0
    %1178 = vmatprep.subr.mxu0 0.0
    %1179 = vmatpush1.msra.mxu0 0.0
    %1180 = vmatprep.subr.mxu0 0.0
    %1181 = vmatpush1.msra.mxu0 0.0
    %1182 = vmatprep.subr.mxu0 0.0
    %1183 = vmatpush1.msra.mxu0 0.0
    %1184 = vmatprep.subr.mxu0 0.0
    %1185 = vmatpush1.msra.mxu0 0.0
    %1186 = vmatprep.subr.mxu0 0.0
    %1187 = vmatpush1.msra.mxu0 0.0
    %1188 = vmatprep.subr.mxu0 0.0
    %1189 = vmatpush1.msra.mxu0 0.0
    %1190 = vmatprep.subr.mxu0 0.0
    %1191 = vmatpush1.msra.mxu0 0.0
    %1192 = vmatprep.subr.mxu0 0.0
    %1193 = vmatpush1.msra.mxu0 0.0
    %1194 = vmatprep.mubr.f32.mxu0 0.0
    %1195 = vmatmul.mubr.f32.gmra.mrb[0].mxu0 %v1128
    %v1196 = vpop.f32.mrb[0].mxu0
    %v1197 = vadd.f32 0.0, %v1196
    %v1198 = vpop.f32.mrb[0].mxu0
    %1199 = vdwg.mxu0
    %v1200 = vsel %vm189, %v1123, 0.0
    %1201 = vadd.xlane.f32.xlu0 %v1200
    %v1202 = vpop.xlane.xlu0 %1201
    %v1203 = vrcp.pop %v1202
    %v1204 = vmul.f32 %v1197, %v1203
    %1206 = vrot.lane.b32.xlu0 %v1204, 8
    %v1207 = vpop.permute.xlu0 %1206
    %1209 = vst.msk [vmem:[#allocation2 + $0x8] sm:$0xff] %vm523, %v1207
    %s1210 = scalar_lea.vmem %s1, 48
    %v1211 = vld [vmem:[%s1210] sm:$0xff]
    %1212 = vrot.lane.b32.xlu0 %v182, 112
    %v1213 = vpop.permute.xlu0 %1212
    %1214 = vrot.lane.b32.xlu0 %v182, 80
    %v1215 = vpop.permute.xlu0 %1214
    %v1216 = vsel %vm189, %v1213, 0
    %v1218 = vsel %vm189, %v1215, 0
    %1220 = vmatprep.subr.mxu0 0.0
    %1221 = vmatpush1.xpose.msra.mxu0 %v1218
    %1222 = vmatprep.subr.mxu0 0.0
    %1223 = vmatpush1.xpose.msra.mxu0 0.0
    %1224 = vmatprep.subr.mxu0 0.0
    %1225 = vmatpush1.xpose.msra.mxu0 0.0
    %1226 = vmatprep.subr.mxu0 0.0
    %1227 = vmatpush1.xpose.msra.mxu0 0.0
    %1228 = vmatprep.subr.mxu0 0.0
    %1229 = vmatpush1.xpose.msra.mxu0 0.0
    %1230 = vmatprep.subr.mxu0 0.0
    %1231 = vmatpush1.xpose.msra.mxu0 0.0
    %1232 = vmatprep.subr.mxu0 0.0
    %1233 = vmatpush1.xpose.msra.mxu0 0.0
    %1234 = vmatprep.subr.mxu0 0.0
    %1235 = vmatpush1.xpose.msra.mxu0 0.0
    %1236 = vmatprep.subr.mxu0 0.0
    %1237 = vmatpush1.xpose.msra.mxu0 0.0
    %1238 = vmatprep.subr.mxu0 0.0
    %1239 = vmatpush1.xpose.msra.mxu0 0.0
    %1240 = vmatprep.subr.mxu0 0.0
    %1241 = vmatpush1.xpose.msra.mxu0 0.0
    %1242 = vmatprep.subr.mxu0 0.0
    %1243 = vmatpush1.xpose.msra.mxu0 0.0
    %1244 = vmatprep.subr.mxu0 0.0
    %1245 = vmatpush1.xpose.msra.mxu0 0.0
    %1246 = vmatprep.subr.mxu0 0.0
    %1247 = vmatpush1.xpose.msra.mxu0 0.0
    %1248 = vmatprep.subr.mxu0 0.0
    %1249 = vmatpush1.xpose.msra.mxu0 0.0
    %1250 = vmatprep.subr.mxu0 0.0
    %1251 = vmatpush1.xpose.msra.mxu0 0.0
    %1252 = vmatprep.subr.mxu0 0.0
    %1253 = vmatpush1.xpose.msra.mxu0 0.0
    %1254 = vmatprep.subr.mxu0 0.0
    %1255 = vmatpush1.xpose.msra.mxu0 0.0
    %1256 = vmatprep.subr.mxu0 0.0
    %1257 = vmatpush1.xpose.msra.mxu0 0.0
    %1258 = vmatprep.subr.mxu0 0.0
    %1259 = vmatpush1.xpose.msra.mxu0 0.0
    %1260 = vmatprep.subr.mxu0 0.0
    %1261 = vmatpush1.xpose.msra.mxu0 0.0
    %1262 = vmatprep.subr.mxu0 0.0
    %1263 = vmatpush1.xpose.msra.mxu0 0.0
    %1264 = vmatprep.subr.mxu0 0.0
    %1265 = vmatpush1.xpose.msra.mxu0 0.0
    %1266 = vmatprep.subr.mxu0 0.0
    %1267 = vmatpush1.xpose.msra.mxu0 0.0
    %1268 = vmatprep.subr.mxu0 0.0
    %1269 = vmatpush1.xpose.msra.mxu0 0.0
    %1270 = vmatprep.subr.mxu0 0.0
    %1271 = vmatpush1.xpose.msra.mxu0 0.0
    %1272 = vmatprep.subr.mxu0 0.0
    %1273 = vmatpush1.xpose.msra.mxu0 0.0
    %1274 = vmatprep.subr.mxu0 0.0
    %1275 = vmatpush1.xpose.msra.mxu0 0.0
    %1276 = vmatprep.subr.mxu0 0.0
    %1277 = vmatpush1.xpose.msra.mxu0 0.0
    %1278 = vmatprep.subr.mxu0 0.0
    %1279 = vmatpush1.xpose.msra.mxu0 0.0
    %1280 = vmatprep.subr.mxu0 0.0
    %1281 = vmatpush1.xpose.msra.mxu0 0.0
    %1282 = vmatprep.subr.mxu0 0.0
    %1283 = vmatpush1.xpose.msra.mxu0 0.0
    %1284 = vmatprep.mubr.f32.mxu0 0.0
    %1285 = vmatmul.mubr.f32.gmra.mrb[0].mxu0 %v1216
    %v1286 = vpop.f32.mrb[0].mxu0
    %v1287 = vadd.f32 %v1211, %v1286
    %v1288 = vpop.f32.mrb[0].mxu0
    %1289 = vdwg.mxu0
    %v1290 = vsel %vm189, %v1287, -inf
    %1291 = vmax.xlane.f32.xlu0 %v1290
    %v1292 = vpop.xlane.xlu0 %1291
    %v1293 = vsub.f32 %v1287, %v1292
    %v1294 = vmul.f32 %v1293, 1.442695
    %v1295 = vpow.pop %v1294
    %1296 = vrot.lane.b32.xlu0 %v182, 48
    %v1297 = vpop.permute.xlu0 %1296
    %v1300 = vsel %vm189, %v1295, 0
    %1302 = vmatprep.subr.mxu0 0.0
    %1303 = vmatpush1.msra.mxu0 %v1297
    %1304 = vmatprep.subr.mxu0 0.0
    %1305 = vmatpush1.msra.mxu0 0.0
    %1306 = vmatprep.subr.mxu0 0.0
    %1307 = vmatpush1.msra.mxu0 0.0
    %1308 = vmatprep.subr.mxu0 0.0
    %1309 = vmatpush1.msra.mxu0 0.0
    %1310 = vmatprep.subr.mxu0 0.0
    %1311 = vmatpush1.msra.mxu0 0.0
    %1312 = vmatprep.subr.mxu0 0.0
    %1313 = vmatpush1.msra.mxu0 0.0
    %1314 = vmatprep.subr.mxu0 0.0
    %1315 = vmatpush1.msra.mxu0 0.0
    %1316 = vmatprep.subr.mxu0 0.0
    %1317 = vmatpush1.msra.mxu0 0.0
    %1318 = vmatprep.subr.mxu0 0.0
    %1319 = vmatpush1.msra.mxu0 0.0
    %1320 = vmatprep.subr.mxu0 0.0
    %1321 = vmatpush1.msra.mxu0 0.0
    %1322 = vmatprep.subr.mxu0 0.0
    %1323 = vmatpush1.msra.mxu0 0.0
    %1324 = vmatprep.subr.mxu0 0.0
    %1325 = vmatpush1.msra.mxu0 0.0
    %1326 = vmatprep.subr.mxu0 0.0
    %1327 = vmatpush1.msra.mxu0 0.0
    %1328 = vmatprep.subr.mxu0 0.0
    %1329 = vmatpush1.msra.mxu0 0.0
    %1330 = vmatprep.subr.mxu0 0.0
    %1331 = vmatpush1.msra.mxu0 0.0
    %1332 = vmatprep.subr.mxu0 0.0
    %1333 = vmatpush1.msra.mxu0 0.0
    %1334 = vmatprep.subr.mxu0 0.0
    %1335 = vmatpush1.msra.mxu0 0.0
    %1336 = vmatprep.subr.mxu0 0.0
    %1337 = vmatpush1.msra.mxu0 0.0
    %1338 = vmatprep.subr.mxu0 0.0
    %1339 = vmatpush1.msra.mxu0 0.0
    %1340 = vmatprep.subr.mxu0 0.0
    %1341 = vmatpush1.msra.mxu0 0.0
    %1342 = vmatprep.subr.mxu0 0.0
    %1343 = vmatpush1.msra.mxu0 0.0
    %1344 = vmatprep.subr.mxu0 0.0
    %1345 = vmatpush1.msra.mxu0 0.0
    %1346 = vmatprep.subr.mxu0 0.0
    %1347 = vmatpush1.msra.mxu0 0.0
    %1348 = vmatprep.subr.mxu0 0.0
    %1349 = vmatpush1.msra.mxu0 0.0
    %1350 = vmatprep.subr.mxu0 0.0
    %1351 = vmatpush1.msra.mxu0 0.0
    %1352 = vmatprep.subr.mxu0 0.0
    %1353 = vmatpush1.msra.mxu0 0.0
    %1354 = vmatprep.subr.mxu0 0.0
    %1355 = vmatpush1.msra.mxu0 0.0
    %1356 = vmatprep.subr.mxu0 0.0
    %1357 = vmatpush1.msra.mxu0 0.0
    %1358 = vmatprep.subr.mxu0 0.0
    %1359 = vmatpush1.msra.mxu0 0.0
    %1360 = vmatprep.subr.mxu0 0.0
    %1361 = vmatpush1.msra.mxu0 0.0
    %1362 = vmatprep.subr.mxu0 0.0
    %1363 = vmatpush1.msra.mxu0 0.0
    %1364 = vmatprep.subr.mxu0 0.0
    %1365 = vmatpush1.msra.mxu0 0.0
    %1366 = vmatprep.mubr.f32.mxu0 0.0
    %1367 = vmatmul.mubr.f32.gmra.mrb[0].mxu0 %v1300
    %v1368 = vpop.f32.mrb[0].mxu0
    %v1369 = vadd.f32 0.0, %v1368
    %v1370 = vpop.f32.mrb[0].mxu0
    %1371 = vdwg.mxu0
    %v1372 = vsel %vm189, %v1295, 0.0
    %1373 = vadd.xlane.f32.xlu0 %v1372
    %v1374 = vpop.xlane.xlu0 %1373
    %v1375 = vrcp.pop %v1374
    %v1376 = vmul.f32 %v1369, %v1375
    %1378 = vrot.lane.b32.xlu0 %v1376, 16
    %v1379 = vpop.permute.xlu0 %1378
    %1381 = vst.msk [vmem:[#allocation2 + $0x8] sm:$0xff] %vm696, %v1379
    %s1382 = scalar_lea.vmem %s1, 56
    %v1383 = vld [vmem:[%s1382] sm:$0xff]
    %1384 = vrot.lane.b32.xlu0 %v182, 104
    %v1385 = vpop.permute.xlu0 %1384
    %1386 = vrot.lane.b32.xlu0 %v182, 72
    %v1387 = vpop.permute.xlu0 %1386
    %v1388 = vsel %vm189, %v1385, 0
    %v1390 = vsel %vm189, %v1387, 0
    %1392 = vmatprep.subr.mxu0 0.0
    %1393 = vmatpush1.xpose.msra.mxu0 %v1390
    %1394 = vmatprep.subr.mxu0 0.0
    %1395 = vmatpush1.xpose.msra.mxu0 0.0
    %1396 = vmatprep.subr.mxu0 0.0
    %1397 = vmatpush1.xpose.msra.mxu0 0.0
    %1398 = vmatprep.subr.mxu0 0.0
    %1399 = vmatpush1.xpose.msra.mxu0 0.0
    %1400 = vmatprep.subr.mxu0 0.0
    %1401 = vmatpush1.xpose.msra.mxu0 0.0
    %1402 = vmatprep.subr.mxu0 0.0
    %1403 = vmatpush1.xpose.msra.mxu0 0.0
    %1404 = vmatprep.subr.mxu0 0.0
    %1405 = vmatpush1.xpose.msra.mxu0 0.0
    %1406 = vmatprep.subr.mxu0 0.0
    %1407 = vmatpush1.xpose.msra.mxu0 0.0
    %1408 = vmatprep.subr.mxu0 0.0
    %1409 = vmatpush1.xpose.msra.mxu0 0.0
    %1410 = vmatprep.subr.mxu0 0.0
    %1411 = vmatpush1.xpose.msra.mxu0 0.0
    %1412 = vmatprep.subr.mxu0 0.0
    %1413 = vmatpush1.xpose.msra.mxu0 0.0
    %1414 = vmatprep.subr.mxu0 0.0
    %1415 = vmatpush1.xpose.msra.mxu0 0.0
    %1416 = vmatprep.subr.mxu0 0.0
    %1417 = vmatpush1.xpose.msra.mxu0 0.0
    %1418 = vmatprep.subr.mxu0 0.0
    %1419 = vmatpush1.xpose.msra.mxu0 0.0
    %1420 = vmatprep.subr.mxu0 0.0
    %1421 = vmatpush1.xpose.msra.mxu0 0.0
    %1422 = vmatprep.subr.mxu0 0.0
    %1423 = vmatpush1.xpose.msra.mxu0 0.0
    %1424 = vmatprep.subr.mxu0 0.0
    %1425 = vmatpush1.xpose.msra.mxu0 0.0
    %1426 = vmatprep.subr.mxu0 0.0
    %1427 = vmatpush1.xpose.msra.mxu0 0.0
    %1428 = vmatprep.subr.mxu0 0.0
    %1429 = vmatpush1.xpose.msra.mxu0 0.0
    %1430 = vmatprep.subr.mxu0 0.0
    %1431 = vmatpush1.xpose.msra.mxu0 0.0
    %1432 = vmatprep.subr.mxu0 0.0
    %1433 = vmatpush1.xpose.msra.mxu0 0.0
    %1434 = vmatprep.subr.mxu0 0.0
    %1435 = vmatpush1.xpose.msra.mxu0 0.0
    %1436 = vmatprep.subr.mxu0 0.0
    %1437 = vmatpush1.xpose.msra.mxu0 0.0
    %1438 = vmatprep.subr.mxu0 0.0
    %1439 = vmatpush1.xpose.msra.mxu0 0.0
    %1440 = vmatprep.subr.mxu0 0.0
    %1441 = vmatpush1.xpose.msra.mxu0 0.0
    %1442 = vmatprep.subr.mxu0 0.0
    %1443 = vmatpush1.xpose.msra.mxu0 0.0
    %1444 = vmatprep.subr.mxu0 0.0
    %1445 = vmatpush1.xpose.msra.mxu0 0.0
    %1446 = vmatprep.subr.mxu0 0.0
    %1447 = vmatpush1.xpose.msra.mxu0 0.0
    %1448 = vmatprep.subr.mxu0 0.0
    %1449 = vmatpush1.xpose.msra.mxu0 0.0
    %1450 = vmatprep.subr.mxu0 0.0
    %1451 = vmatpush1.xpose.msra.mxu0 0.0
    %1452 = vmatprep.subr.mxu0 0.0
    %1453 = vmatpush1.xpose.msra.mxu0 0.0
    %1454 = vmatprep.subr.mxu0 0.0
    %1455 = vmatpush1.xpose.msra.mxu0 0.0
    %1456 = vmatprep.mubr.f32.mxu0 0.0
    %1457 = vmatmul.mubr.f32.gmra.mrb[0].mxu0 %v1388
    %v1458 = vpop.f32.mrb[0].mxu0
    %v1459 = vadd.f32 %v1383, %v1458
    %v1460 = vpop.f32.mrb[0].mxu0
    %1461 = vdwg.mxu0
    %v1462 = vsel %vm189, %v1459, -inf
    %1463 = vmax.xlane.f32.xlu0 %v1462
    %v1464 = vpop.xlane.xlu0 %1463
    %v1465 = vsub.f32 %v1459, %v1464
    %v1466 = vmul.f32 %v1465, 1.442695
    %v1467 = vpow.pop %v1466
    %1468 = vrot.lane.b32.xlu0 %v182, 40
    %v1469 = vpop.permute.xlu0 %1468
    %v1472 = vsel %vm189, %v1467, 0
    %1474 = vmatprep.subr.mxu0 0.0
    %1475 = vmatpush1.msra.mxu0 %v1469
    %1476 = vmatprep.subr.mxu0 0.0
    %1477 = vmatpush1.msra.mxu0 0.0
    %1478 = vmatprep.subr.mxu0 0.0
    %1479 = vmatpush1.msra.mxu0 0.0
    %1480 = vmatprep.subr.mxu0 0.0
    %1481 = vmatpush1.msra.mxu0 0.0
    %1482 = vmatprep.subr.mxu0 0.0
    %1483 = vmatpush1.msra.mxu0 0.0
    %1484 = vmatprep.subr.mxu0 0.0
    %1485 = vmatpush1.msra.mxu0 0.0
    %1486 = vmatprep.subr.mxu0 0.0
    %1487 = vmatpush1.msra.mxu0 0.0
    %1488 = vmatprep.subr.mxu0 0.0
    %1489 = vmatpush1.msra.mxu0 0.0
    %1490 = vmatprep.subr.mxu0 0.0
    %1491 = vmatpush1.msra.mxu0 0.0
    %1492 = vmatprep.subr.mxu0 0.0
    %1493 = vmatpush1.msra.mxu0 0.0
    %1494 = vmatprep.subr.mxu0 0.0
    %1495 = vmatpush1.msra.mxu0 0.0
    %1496 = vmatprep.subr.mxu0 0.0
    %1497 = vmatpush1.msra.mxu0 0.0
    %1498 = vmatprep.subr.mxu0 0.0
    %1499 = vmatpush1.msra.mxu0 0.0
    %1500 = vmatprep.subr.mxu0 0.0
    %1501 = vmatpush1.msra.mxu0 0.0
    %1502 = vmatprep.subr.mxu0 0.0
    %1503 = vmatpush1.msra.mxu0 0.0
    %1504 = vmatprep.subr.mxu0 0.0
    %1505 = vmatpush1.msra.mxu0 0.0
    %1506 = vmatprep.subr.mxu0 0.0
    %1507 = vmatpush1.msra.mxu0 0.0
    %1508 = vmatprep.subr.mxu0 0.0
    %1509 = vmatpush1.msra.mxu0 0.0
    %1510 = vmatprep.subr.mxu0 0.0
    %1511 = vmatpush1.msra.mxu0 0.0
    %1512 = vmatprep.subr.mxu0 0.0
    %1513 = vmatpush1.msra.mxu0 0.0
    %1514 = vmatprep.subr.mxu0 0.0
    %1515 = vmatpush1.msra.mxu0 0.0
    %1516 = vmatprep.subr.mxu0 0.0
    %1517 = vmatpush1.msra.mxu0 0.0
    %1518 = vmatprep.subr.mxu0 0.0
    %1519 = vmatpush1.msra.mxu0 0.0
    %1520 = vmatprep.subr.mxu0 0.0
    %1521 = vmatpush1.msra.mxu0 0.0
    %1522 = vmatprep.subr.mxu0 0.0
    %1523 = vmatpush1.msra.mxu0 0.0
    %1524 = vmatprep.subr.mxu0 0.0
    %1525 = vmatpush1.msra.mxu0 0.0
    %1526 = vmatprep.subr.mxu0 0.0
    %1527 = vmatpush1.msra.mxu0 0.0
    %1528 = vmatprep.subr.mxu0 0.0
    %1529 = vmatpush1.msra.mxu0 0.0
    %1530 = vmatprep.subr.mxu0 0.0
    %1531 = vmatpush1.msra.mxu0 0.0
    %1532 = vmatprep.subr.mxu0 0.0
    %1533 = vmatpush1.msra.mxu0 0.0
    %1534 = vmatprep.subr.mxu0 0.0
    %1535 = vmatpush1.msra.mxu0 0.0
    %1536 = vmatprep.subr.mxu0 0.0
    %1537 = vmatpush1.msra.mxu0 0.0
    %1538 = vmatprep.mubr.f32.mxu0 0.0
    %1539 = vmatmul.mubr.f32.gmra.mrb[0].mxu0 %v1472
    %v1540 = vpop.f32.mrb[0].mxu0
    %v1541 = vadd.f32 0.0, %v1540
    %v1542 = vpop.f32.mrb[0].mxu0
    %1543 = vdwg.mxu0
    %v1544 = vsel %vm189, %v1467, 0.0
    %1545 = vadd.xlane.f32.xlu0 %v1544
    %v1546 = vpop.xlane.xlu0 %1545
    %v1547 = vrcp.pop %v1546
    %v1548 = vmul.f32 %v1541, %v1547
    %1550 = vrot.lane.b32.xlu0 %v1548, 24
    %v1551 = vpop.permute.xlu0 %1550
    %1553 = vst.msk [vmem:[#allocation2 + $0x8] sm:$0xff] %vm869, %v1551
    %v1554 = vld [vmem:[#allocation2] sm:$0xff]
    %v1555 = vld [vmem:[#allocation2 + $0x8] sm:$0xff]
    %v1556 = vld [vmem:[#allocation6] sm:$0xff]
    %v1557 = vld [vmem:[#allocation6 + $0x8] sm:$0xff]
    %v1558 = vld [vmem:[#allocation6 + $0x10] sm:$0xff]
    %v1559 = vld [vmem:[#allocation6 + $0x18] sm:$0xff]
    %v1561 = vsel %vm75, %v1554, 0
    %v1564 = vsel %vm75, %v1555, 0
    %1566 = vmatprep.subr.mxu0 0.0
    %1567 = vmatpush1.msra.mxu0 %v1556
    %1568 = vmatprep.subr.mxu0 0.0
    %1569 = vmatpush1.msra.mxu0 %v1557
    %1570 = vmatprep.subr.mxu0 0.0
    %1571 = vmatpush1.msra.mxu0 %v1558
    %1572 = vmatprep.subr.mxu0 0.0
    %1573 = vmatpush1.msra.mxu0 %v1559
    %1574 = vmatprep.subr.mxu0 0.0
    %1575 = vmatpush1.msra.mxu0 0.0
    %1576 = vmatprep.subr.mxu0 0.0
    %1577 = vmatpush1.msra.mxu0 0.0
    %1578 = vmatprep.subr.mxu0 0.0
    %1579 = vmatpush1.msra.mxu0 0.0
    %1580 = vmatprep.subr.mxu0 0.0
    %1581 = vmatpush1.msra.mxu0 0.0
    %1582 = vmatprep.subr.mxu0 0.0
    %1583 = vmatpush1.msra.mxu0 0.0
    %1584 = vmatprep.subr.mxu0 0.0
    %1585 = vmatpush1.msra.mxu0 0.0
    %1586 = vmatprep.subr.mxu0 0.0
    %1587 = vmatpush1.msra.mxu0 0.0
    %1588 = vmatprep.subr.mxu0 0.0
    %1589 = vmatpush1.msra.mxu0 0.0
    %1590 = vmatprep.subr.mxu0 0.0
    %1591 = vmatpush1.msra.mxu0 0.0
    %1592 = vmatprep.subr.mxu0 0.0
    %1593 = vmatpush1.msra.mxu0 0.0
    %1594 = vmatprep.subr.mxu0 0.0
    %1595 = vmatpush1.msra.mxu0 0.0
    %1596 = vmatprep.subr.mxu0 0.0
    %1597 = vmatpush1.msra.mxu0 0.0
    %1598 = vmatprep.subr.mxu0 0.0
    %1599 = vmatpush1.msra.mxu0 0.0
    %1600 = vmatprep.subr.mxu0 0.0
    %1601 = vmatpush1.msra.mxu0 0.0
    %1602 = vmatprep.subr.mxu0 0.0
    %1603 = vmatpush1.msra.mxu0 0.0
    %1604 = vmatprep.subr.mxu0 0.0
    %1605 = vmatpush1.msra.mxu0 0.0
    %1606 = vmatprep.subr.mxu0 0.0
    %1607 = vmatpush1.msra.mxu0 0.0
    %1608 = vmatprep.subr.mxu0 0.0
    %1609 = vmatpush1.msra.mxu0 0.0
    %1610 = vmatprep.subr.mxu0 0.0
    %1611 = vmatpush1.msra.mxu0 0.0
    %1612 = vmatprep.subr.mxu0 0.0
    %1613 = vmatpush1.msra.mxu0 0.0
    %1614 = vmatprep.subr.mxu0 0.0
    %1615 = vmatpush1.msra.mxu0 0.0
    %1616 = vmatprep.subr.mxu0 0.0
    %1617 = vmatpush1.msra.mxu0 0.0
    %1618 = vmatprep.subr.mxu0 0.0
    %1619 = vmatpush1.msra.mxu0 0.0
    %1620 = vmatprep.subr.mxu0 0.0
    %1621 = vmatpush1.msra.mxu0 0.0
    %1622 = vmatprep.subr.mxu0 0.0
    %1623 = vmatpush1.msra.mxu0 0.0
    %1624 = vmatprep.subr.mxu0 0.0
    %1625 = vmatpush1.msra.mxu0 0.0
    %1626 = vmatprep.subr.mxu0 0.0
    %1627 = vmatpush1.msra.mxu0 0.0
    %1628 = vmatprep.subr.mxu0 0.0
    %1629 = vmatpush1.msra.mxu0 0.0
    %1630 = vmatprep.mubr.f32.mxu0 0.0
    %1631 = vmatmul.mubr.f32.gmra.mrb[0].mxu0 %v1561
    %v1632 = vpop.f32.mrb[0].mxu0
    %v1633 = vadd.f32 0.0, %v1632
    %v1634 = vpop.f32.mrb[0].mxu0
    %1635 = vmatprep.mubr.f32.mxu0 0.0
    %1636 = vmatmul.mubr.f32.gmra.mrb[0].mxu0 %v1564
    %v1637 = vpop.f32.mrb[0].mxu0
    %v1638 = vadd.f32 0.0, %v1637
    %v1639 = vpop.f32.mrb[0].mxu0
    %1640 = vdwg.mxu0
    %v1641 = vadd.f32 %v71, %v1633
    %v1642 = vadd.f32 %v72, %v1638
    %v1643 = vmul.f32 %v1641, %v1641
    %v1644 = vmul.f32 %v1642, %v1642
    %v1645 = vsel %vm75, %v1643, 0.0
    %1646 = vadd.xlane.f32.xlu0 %v1645
    %v1647 = vpop.xlane.xlu0 %1646
    %v1648 = vsel %vm75, %v1644, 0.0
    %1649 = vadd.xlane.f32.xlu0 %v1648
    %v1650 = vpop.xlane.xlu0 %1649
    %v1651 = vmul.f32 %v1647, %v82
    %v1652 = vmul.f32 %v1650, %v82
    %v1653 = vadd.f32 %v1651, 1e-06
    %v1654 = vadd.f32 %v1652, 1e-06
    %v1655 = vrsqrt.pop %v1653
    %v1656 = vrsqrt.pop %v1654
    %v1657 = vmul.f32 %v1641, %v1655
    %v1658 = vmul.f32 %v1642, %v1656
    %v1659 = vld [vmem:[%s5] sm:$0x1]
    %v1661 = vlaneseq
    %v1662 = vshrl.u32 %v1661, 7
    %v1663 = vsub.s32 0, %v1662
    %v1664 = vrot.slane %v1659, %v1663
    %v1666 = vmul.f32 %v1657, %v1664
    %v1667 = vmul.f32 %v1658, %v1664
    %v1668 = vld [vmem:[#allocation8] sm:$0xff]
    %v1669 = vld [vmem:[#allocation8 + $0x8] sm:$0xff]
    %v1670 = vld [vmem:[#allocation8 + $0x10] sm:$0xff]
    %v1671 = vld [vmem:[#allocation8 + $0x18] sm:$0xff]
    %v1673 = vsel %vm75, %v1666, 0
    %v1676 = vsel %vm75, %v1667, 0
    %1678 = vmatprep.subr.mxu0 0.0
    %1679 = vmatpush1.msra.mxu0 %v1668
    %1680 = vmatprep.subr.mxu0 0.0
    %1681 = vmatpush1.msra.mxu0 %v1669
    %1682 = vmatprep.subr.mxu0 0.0
    %1683 = vmatpush1.msra.mxu0 %v1670
    %1684 = vmatprep.subr.mxu0 0.0
    %1685 = vmatpush1.msra.mxu0 %v1671
    %1686 = vmatprep.subr.mxu0 0.0
    %1687 = vmatpush1.msra.mxu0 0.0
    %1688 = vmatprep.subr.mxu0 0.0
    %1689 = vmatpush1.msra.mxu0 0.0
    %1690 = vmatprep.subr.mxu0 0.0
    %1691 = vmatpush1.msra.mxu0 0.0
    %1692 = vmatprep.subr.mxu0 0.0
    %1693 = vmatpush1.msra.mxu0 0.0
    %1694 = vmatprep.subr.mxu0 0.0
    %1695 = vmatpush1.msra.mxu0 0.0
    %1696 = vmatprep.subr.mxu0 0.0
    %1697 = vmatpush1.msra.mxu0 0.0
    %1698 = vmatprep.subr.mxu0 0.0
    %1699 = vmatpush1.msra.mxu0 0.0
    %1700 = vmatprep.subr.mxu0 0.0
    %1701 = vmatpush1.msra.mxu0 0.0
    %1702 = vmatprep.subr.mxu0 0.0
    %1703 = vmatpush1.msra.mxu0 0.0
    %1704 = vmatprep.subr.mxu0 0.0
    %1705 = vmatpush1.msra.mxu0 0.0
    %1706 = vmatprep.subr.mxu0 0.0
    %1707 = vmatpush1.msra.mxu0 0.0
    %1708 = vmatprep.subr.mxu0 0.0
    %1709 = vmatpush1.msra.mxu0 0.0
    %1710 = vmatprep.subr.mxu0 0.0
    %1711 = vmatpush1.msra.mxu0 0.0
    %1712 = vmatprep.subr.mxu0 0.0
    %1713 = vmatpush1.msra.mxu0 0.0
    %1714 = vmatprep.subr.mxu0 0.0
    %1715 = vmatpush1.msra.mxu0 0.0
    %1716 = vmatprep.subr.mxu0 0.0
    %1717 = vmatpush1.msra.mxu0 0.0
    %1718 = vmatprep.subr.mxu0 0.0
    %1719 = vmatpush1.msra.mxu0 0.0
    %1720 = vmatprep.subr.mxu0 0.0
    %1721 = vmatpush1.msra.mxu0 0.0
    %1722 = vmatprep.subr.mxu0 0.0
    %1723 = vmatpush1.msra.mxu0 0.0
    %1724 = vmatprep.subr.mxu0 0.0
    %1725 = vmatpush1.msra.mxu0 0.0
    %1726 = vmatprep.subr.mxu0 0.0
    %1727 = vmatpush1.msra.mxu0 0.0
    %1728 = vmatprep.subr.mxu0 0.0
    %1729 = vmatpush1.msra.mxu0 0.0
    %1730 = vmatprep.subr.mxu0 0.0
    %1731 = vmatpush1.msra.mxu0 0.0
    %1732 = vmatprep.subr.mxu0 0.0
    %1733 = vmatpush1.msra.mxu0 0.0
    %1734 = vmatprep.subr.mxu0 0.0
    %1735 = vmatpush1.msra.mxu0 0.0
    %1736 = vmatprep.subr.mxu0 0.0
    %1737 = vmatpush1.msra.mxu0 0.0
    %1738 = vmatprep.subr.mxu0 0.0
    %1739 = vmatpush1.msra.mxu0 0.0
    %1740 = vmatprep.subr.mxu0 0.0
    %1741 = vmatpush1.msra.mxu0 0.0
    %1742 = vmatprep.mubr.f32.mxu0 0.0
    %1743 = vmatmul.mubr.f32.gmra.mrb[0].mxu0 %v1673
    %v1744 = vpop.f32.mrb[0].mxu0
    %v1745 = vadd.f32 0.0, %v1744
    %v1746 = vpop.f32.mrb[0].mxu0
    %1747 = vmatprep.mubr.f32.mxu0 0.0
    %1748 = vmatmul.mubr.f32.gmra.mrb[0].mxu0 %v1676
    %v1749 = vpop.f32.mrb[0].mxu0
    %v1750 = vadd.f32 0.0, %v1749
    %v1751 = vpop.f32.mrb[0].mxu0
    %1752 = vdwg.mxu0
    %v1753 = vmul.f32 %v1745, 0.5
    %v1754 = vmul.f32 %v1750, 0.5
    %v1755 = vmul.f32 %v1745, 0.044715
    %v1756 = vmul.f32 %v1750, 0.044715
    %v1757 = vmul.f32 %v1755, %v1745
    %v1758 = vmul.f32 %v1756, %v1750
    %v1759 = vmul.f32 %v1757, %v1745
    %v1760 = vmul.f32 %v1758, %v1750
    %v1761 = vadd.f32 %v1745, %v1759
    %v1762 = vadd.f32 %v1750, %v1760
    %v1763 = vmul.f32 %v1761, 0.7978846
    %v1764 = vmul.f32 %v1762, 0.7978846
    %v1765 = vtanh.pop %v1763
    %v1766 = vtanh.pop %v1764
    %v1767 = vadd.f32 %v1765, 1.0
    %v1768 = vadd.f32 %v1766, 1.0
    %v1769 = vmul.f32 %v1753, %v1767
    %v1770 = vmul.f32 %v1754, %v1768
    %1773 = vrot.lane.b32.xlu0 %v1745, 64
    %v1774 = vpop.permute.xlu0 %1773
    %1775 = vrot.lane.b32.xlu0 %v1750, 64
    %v1776 = vpop.permute.xlu0 %1775
    %v1779 = vmul.f32 %v1769, %v1774
    %v1780 = vmul.f32 %v1770, %v1776
    %v1781 = vld [vmem:[%s7] sm:$0xff]
    %v1782 = vld [vmem:[%s7 + $0x8] sm:$0xff]
    %v1783 = vld [vmem:[%s7 + $0x10] sm:$0xff]
    %v1784 = vld [vmem:[%s7 + $0x18] sm:$0xff]
    %v1785 = vld [vmem:[%s7 + $0x20] sm:$0xff]
    %v1786 = vld [vmem:[%s7 + $0x28] sm:$0xff]
    %v1787 = vld [vmem:[%s7 + $0x30] sm:$0xff]
    %v1788 = vld [vmem:[%s7 + $0x38] sm:$0xff]
    %vm1789 = vcmask 523264
    %v1791 = vsel %vm1789, %v1779, 0
    %v1794 = vsel %vm1789, %v1780, 0
    %1796 = vmatprep.subr.mxu0 0.0
    %1797 = vmatpush1.msra.mxu0 %v1781
    %1798 = vmatprep.subr.mxu0 0.0
    %1799 = vmatpush1.msra.mxu0 %v1782
    %1800 = vmatprep.subr.mxu0 0.0
    %1801 = vmatpush1.msra.mxu0 %v1783
    %1802 = vmatprep.subr.mxu0 0.0
    %1803 = vmatpush1.msra.mxu0 %v1784
    %1804 = vmatprep.subr.mxu0 0.0
    %1805 = vmatpush1.msra.mxu0 %v1785
    %1806 = vmatprep.subr.mxu0 0.0
    %1807 = vmatpush1.msra.mxu0 %v1786
    %1808 = vmatprep.subr.mxu0 0.0
    %1809 = vmatpush1.msra.mxu0 %v1787
    %1810 = vmatprep.subr.mxu0 0.0
    %1811 = vmatpush1.msra.mxu0 %v1788
    %1812 = vmatprep.subr.mxu0 0.0
    %1813 = vmatpush1.msra.mxu0 0.0
    %1814 = vmatprep.subr.mxu0 0.0
    %1815 = vmatpush1.msra.mxu0 0.0
    %1816 = vmatprep.subr.mxu0 0.0
    %1817 = vmatpush1.msra.mxu0 0.0
    %1818 = vmatprep.subr.mxu0 0.0
    %1819 = vmatpush1.msra.mxu0 0.0
    %1820 = vmatprep.subr.mxu0 0.0
    %1821 = vmatpush1.msra.mxu0 0.0
    %1822 = vmatprep.subr.mxu0 0.0
    %1823 = vmatpush1.msra.mxu0 0.0
    %1824 = vmatprep.subr.mxu0 0.0
    %1825 = vmatpush1.msra.mxu0 0.0
    %1826 = vmatprep.subr.mxu0 0.0
    %1827 = vmatpush1.msra.mxu0 0.0
    %1828 = vmatprep.subr.mxu0 0.0
    %1829 = vmatpush1.msra.mxu0 0.0
    %1830 = vmatprep.subr.mxu0 0.0
    %1831 = vmatpush1.msra.mxu0 0.0
    %1832 = vmatprep.subr.mxu0 0.0
    %1833 = vmatpush1.msra.mxu0 0.0
    %1834 = vmatprep.subr.mxu0 0.0
    %1835 = vmatpush1.msra.mxu0 0.0
    %1836 = vmatprep.subr.mxu0 0.0
    %1837 = vmatpush1.msra.mxu0 0.0
    %1838 = vmatprep.subr.mxu0 0.0
    %1839 = vmatpush1.msra.mxu0 0.0
    %1840 = vmatprep.subr.mxu0 0.0
    %1841 = vmatpush1.msra.mxu0 0.0
    %1842 = vmatprep.subr.mxu0 0.0
    %1843 = vmatpush1.msra.mxu0 0.0
    %1844 = vmatprep.subr.mxu0 0.0
    %1845 = vmatpush1.msra.mxu0 0.0
    %1846 = vmatprep.subr.mxu0 0.0
    %1847 = vmatpush1.msra.mxu0 0.0
    %1848 = vmatprep.subr.mxu0 0.0
    %1849 = vmatpush1.msra.mxu0 0.0
    %1850 = vmatprep.subr.mxu0 0.0
    %1851 = vmatpush1.msra.mxu0 0.0
    %1852 = vmatprep.subr.mxu0 0.0
    %1853 = vmatpush1.msra.mxu0 0.0
    %1854 = vmatprep.subr.mxu0 0.0
    %1855 = vmatpush1.msra.mxu0 0.0
    %1856 = vmatprep.subr.mxu0 0.0
    %1857 = vmatpush1.msra.mxu0 0.0
    %1858 = vmatprep.subr.mxu0 0.0
    %1859 = vmatpush1.msra.mxu0 0.0
    %1860 = vmatprep.mubr.f32.mxu0 0.0
    %1861 = vmatmul.mubr.f32.gmra.mrb[0].mxu0 %v1791
    %v1862 = vpop.f32.mrb[0].mxu0
    %v1863 = vadd.f32 0.0, %v1862
    %v1864 = vpop.f32.mrb[0].mxu0
    %1865 = vmatprep.mubr.f32.mxu0 0.0
    %1866 = vmatmul.mubr.f32.gmra.mrb[0].mxu0 %v1794
    %v1867 = vpop.f32.mrb[0].mxu0
    %v1868 = vadd.f32 0.0, %v1867
    %v1869 = vpop.f32.mrb[0].mxu0
    %1870 = vdwg.mxu0
    %v1871 = vadd.f32 %v1641, %v1863
    %v1872 = vadd.f32 %v1642, %v1868
    %1873 = vst.msk [vmem:[#allocation9] sm:$0xff] %vm75, %v1871
    %1874 = vst.msk [vmem:[#allocation9 + $0x8] sm:$0xff] %vm75, %v1872
    // Predicated region
    $region46: #{tpu_custom_call.1} parent=1 // pred_check
      _
    $region47: #{tpu_custom_call.1} parent=1 // pred_check_branch
      %1876 = sbr.rel (0) target = $region49
    $region48: #{tpu_custom_call.1} parent=1 // pred_region
      %s1878 = ssub.s32 256, 256
      %1879 = vsyncadd [#allocation5], %s1878
      %s1880 = sshll.u32 [#allocation9], 4
      %s1881 = int_to_ptr.vmem [resolvable:$true] %s1880
      %1886 = dma.vmem_to_hbm [thread:$0]  %s1881, 256, %s8, [#allocation5], 128, 128, 8
    $region49: #{tpu_custom_call.1} parent=1 // pred_fallthru
      _
    // Predicated region
    $region50: #{tpu_custom_call.1} parent=1 // pred_check
      _
    $region51: #{tpu_custom_call.1} parent=1 // pred_check_branch
      %1888 = sbr.rel (0) target = $region53
    $region52: #{tpu_custom_call.1} parent=1 // pred_region
      %1889 = dma.done [#allocation5], 256
    $region53: #{tpu_custom_call.1} parent=1 // pred_fallthru
      _
    %1890 = vsyncpa [#allocation4], 1
    %1891 = vsyncpa [#allocation7], 1
    %1892 = vsyncpa [#allocation5], 1

</llo_original>
